<compile_context>
chip_gen: v7x
topology: tpu7x:2x2x1
jax: 0.10.0
libtpu: 0.0.40
codegen_flags: <defaults>
</compile_context>

<pallas_src>
import math
from functools import partial

import jax
import jax.numpy as jnp
from jax import lax
from jax.experimental import pallas as pl
from jax.experimental.pallas import tpu as pltpu


def _gelu(x, approximate):
    """GELU. approximate=False -> exact erf (PyTorch F.gelu default, VALU-heavy);
    approximate=True -> tanh form (EUP slot, ~1e-3 deviation)."""
    if approximate:
        c = math.sqrt(2.0 / math.pi)
        inner = c * (x + 0.044715 * (x * x * x))
        return (0.5 * x * (1.0 + jnp.tanh(inner))).astype(x.dtype)
    return (0.5 * x * (1.0 + lax.erf(x * (1.0 / math.sqrt(2.0))))).astype(x.dtype)


def _encoder_jet_kernel(x_ref, w1_ref, b1_ref, w2_ref, b2_ref, w3_ref, b3_ref,
                        z_ref, *, chunk, approximate_gelu, gelu_dtype):
    # Hoist resident weights/biases out of the inner loop (loaded once per grid step).
    w1 = w1_ref[...]
    b1 = b1_ref[...]
    w2 = w2_ref[...]
    b2 = b2_ref[...]
    w3 = w3_ref[...]
    b3 = b3_ref[...]

    n_chunks = x_ref.shape[0] // chunk  # static

    def body(c, carry):
        # chunk-row sub-block: keeps (chunk,128) f32 intermediates inside the
        # 64-vreg budget even when the grid tile (tm) is large.
        r0 = pl.multiple_of(c * chunk, chunk)
        x = x_ref[pl.ds(r0, chunk), :]                                   # bf16

        # fc1 + GELU (bf16 MXU operands, f32 accumulation + bias)
        h = jnp.dot(x, w1, preferred_element_type=jnp.float32) + b1
        h = _gelu(h.astype(gelu_dtype), approximate_gelu)

        # fc2 + GELU
        h = jnp.dot(h.astype(jnp.bfloat16), w2,
                    preferred_element_type=jnp.float32) + b2
        h = _gelu(h.astype(gelu_dtype), approximate_gelu)

        # fc3 (no activation) -> unpadded (chunk, z_dim) f32 store
        z = jnp.dot(h.astype(jnp.bfloat16), w3,
                    preferred_element_type=jnp.float32) + b3
        z_ref[pl.ds(r0, chunk), :] = z.astype(z_ref.dtype)
        return carry

    # unroll=True gives the LLO scheduler full visibility of the short fixed loop.
    lax.fori_loop(0, n_chunks, body, 0, unroll=True)


def prepare_params(params):
    """One-time conversion of PyTorch-layout params (out, in) -> kernel layout.

    Transposes to (in, out) and casts weights to bf16. No output padding: the
    kernel now writes the true z_dim columns. Call once, reuse every forward.
    """
    w1 = jnp.asarray(params["w1"]).T.astype(jnp.bfloat16)      # (D_in, H)
    w2 = jnp.asarray(params["w2"]).T.astype(jnp.bfloat16)      # (H, H)
    w3 = jnp.asarray(params["w3"]).T.astype(jnp.bfloat16)      # (H, Z)
    b1 = jnp.asarray(params["b1"], jnp.float32)[None, :]       # (1, H)
    b2 = jnp.asarray(params["b2"], jnp.float32)[None, :]       # (1, H)
    b3 = jnp.asarray(params["b3"], jnp.float32)[None, :]       # (1, Z)
    return {"w1": w1, "b1": b1, "w2": w2, "b2": b2, "w3": w3, "b3": b3}


def encoder_jet(x, kparams, *, tm=1024, chunk=256,
                approximate_gelu=False, gelu_dtype=jnp.float32):
    """Fused EncoderJet forward.

    x: (N, input_dim) float (cast to bf16 once here).  kparams: prepare_params().
    tm: rows per grid step (sweep 1024-2048).  chunk: in-kernel sub-block rows.
    approximate_gelu: tanh GELU on the EUP slot (fast; ~1e-3 off exact erf).
    gelu_dtype: jnp.bfloat16 on v6e/v7x for 2x VALU throughput; keep f32 on v5e.
    """
    n, d_in = x.shape
    hidden = kparams["w1"].shape[1]
    z_dim = kparams["w3"].shape[1]

    chunk = min(chunk, tm)
    assert tm % chunk == 0 and chunk % 16 == 0, "chunk must divide tm; 16-row aligned"

    n_blocks = pl.cdiv(n, tm)
    n_pad = n_blocks * tm

    # bf16 once in the wrapper: halves the x HBM read, no per-tile VALU cast.
    x = x.astype(jnp.bfloat16)
    if n_pad != n:
        x = jnp.pad(x, ((0, n_pad - n), (0, 0)))  # zero rows flow through harmlessly

    resident = lambda a: pl.BlockSpec(a.shape, lambda i: (0, 0))
    weights = (kparams["w1"], kparams["b1"], kparams["w2"], kparams["b2"],
               kparams["w3"], kparams["b3"])
    w_bytes = sum(int(w.size) * w.dtype.itemsize for w in weights)
    cost = pl.CostEstimate(
        flops=2 * n_pad * (d_in * hidden + hidden * hidden + hidden * z_dim),
        transcendentals=2 * n_pad * hidden,                       # two GELUs
        bytes_accessed=int(x.size) * x.dtype.itemsize             # bf16 input
        + w_bytes                                                 # resident params
        + n_pad * z_dim * 4,                                      # unpadded f32 out
    )

    kernel = partial(_encoder_jet_kernel, chunk=chunk,
                     approximate_gelu=approximate_gelu, gelu_dtype=gelu_dtype)

    out = pl.pallas_call(
        kernel,
        out_shape=jax.ShapeDtypeStruct((n_pad, z_dim), jnp.float32),
        grid=(n_blocks,),
        in_specs=[
            pl.BlockSpec((tm, d_in), lambda i: (i, 0)),   # x row tile (double-buffered)
            resident(kparams["w1"]), resident(kparams["b1"]),
            resident(kparams["w2"]), resident(kparams["b2"]),
            resident(kparams["w3"]), resident(kparams["b3"]),
        ],
        out_specs=pl.BlockSpec((tm, z_dim), lambda i: (i, 0)),
        compiler_params=pltpu.CompilerParams(
            dimension_semantics=("parallel",),    # shard rows across TCs on v7x
            vmem_limit_bytes=32 * 1024 * 1024,    # covers v5e's 16 MiB default, safe on v7x
        ),
        cost_estimate=cost,
    )(x, *weights)

    return out[:n, :]


def init_params(key, input_dim, hidden_dim, z_dim):
    """Deterministic PyTorch-Linear-style init, stored PyTorch-style (out, in)."""
    ks = jax.random.split(key, 6)

    def lin(kw, kb, fan_in, fan_out):
        bound = 1.0 / math.sqrt(fan_in)
        w = jax.random.uniform(kw, (fan_out, fan_in), jnp.float32, -bound, bound)
        b = jax.random.uniform(kb, (fan_out,), jnp.float32, -bound, bound)
        return w, b

    w1, b1 = lin(ks[0], ks[1], input_dim, hidden_dim)
    w2, b2 = lin(ks[2], ks[3], hidden_dim, hidden_dim)
    w3, b3 = lin(ks[4], ks[5], hidden_dim, z_dim)
    return {"w1": w1, "b1": b1, "w2": w2, "b2": b2, "w3": w3, "b3": b3}


def encoder_jet_ref(x, params):
    """Pure-JAX f32 reference of the PyTorch forward (exact erf GELU)."""
    h = jax.nn.gelu(x @ params["w1"].T + params["b1"], approximate=False)
    h = jax.nn.gelu(h @ params["w2"].T + params["b2"], approximate=False)
    return h @ params["w3"].T + params["b3"]


if __name__ == "__main__":
    # Module defaults: input_dim=4, hidden_dim=128, z_dim=32.  Small test shapes.
    input_dim, hidden_dim, z_dim = 4, 128, 32
    n = 512

    key = jax.random.PRNGKey(0)
    k_x, k_p = jax.random.split(key)

    x = jax.random.normal(k_x, (n, input_dim), dtype=jnp.float32)
    params = init_params(k_p, input_dim, hidden_dim, z_dim)
    kparams = prepare_params(params)     # one-time transpose / bf16 cast

    z_ref = encoder_jet_ref(x, params)

    # Default path: exact-erf GELU (matches PyTorch F.gelu semantics; bf16 MXU tolerance).
    # tm=256 / chunk=128 keeps the test small while exercising the inner sub-chunk loop.
    z = encoder_jet(x, kparams, tm=256, chunk=128)
    z = jax.block_until_ready(z)
    assert z.shape == (n, z_dim)
    assert jnp.allclose(z, z_ref, atol=5e-2, rtol=5e-2), "exact-GELU path mismatch"

    # Flag-gated fast path: tanh GELU on the EUP slot (review's top perf suggestion).
    z_fast = encoder_jet(x, kparams, tm=256, chunk=128, approximate_gelu=True)
    z_fast = jax.block_until_ready(z_fast)
    assert jnp.allclose(z_fast, z_ref, atol=5e-2, rtol=5e-2), "tanh-GELU path mismatch"

    print("KERNEL_OK")
</pallas_src>

<mosaic_0001>
module attributes {stable_mosaic.version = 11 : i64} {
  func.func @_encoder_jet_kernel(%arg0: i32, %arg1: memref<256x4xbf16, #tpu.memory_space<vmem>>, %arg2: memref<4x128xbf16, #tpu.memory_space<vmem>>, %arg3: memref<1x128xf32, #tpu.memory_space<vmem>>, %arg4: memref<128x128xbf16, #tpu.memory_space<vmem>>, %arg5: memref<1x128xf32, #tpu.memory_space<vmem>>, %arg6: memref<128x32xbf16, #tpu.memory_space<vmem>>, %arg7: memref<1x32xf32, #tpu.memory_space<vmem>>, %arg8: memref<256x32xf32, #tpu.memory_space<vmem>>) attributes {dimension_semantics = [#tpu.dimension_semantics<parallel>], iteration_bounds = array<i64: 2>, scalar_prefetch = 0 : i64, scratch_operands = 0 : i64, tpu.core_type = #tpu.core_type<tc>, window_params = [{transform_indices = @transform_0, window_bounds = array<i64: 256, 4>}, {pipeline_mode = #tpu.pipeline_mode<synchronous>, transform_indices = @transform_1, window_bounds = array<i64: 4, 128>}, {pipeline_mode = #tpu.pipeline_mode<synchronous>, transform_indices = @transform_2, window_bounds = array<i64: 1, 128>}, {pipeline_mode = #tpu.pipeline_mode<synchronous>, transform_indices = @transform_3, window_bounds = array<i64: 128, 128>}, {pipeline_mode = #tpu.pipeline_mode<synchronous>, transform_indices = @transform_4, window_bounds = array<i64: 1, 128>}, {pipeline_mode = #tpu.pipeline_mode<synchronous>, transform_indices = @transform_5, window_bounds = array<i64: 128, 32>}, {pipeline_mode = #tpu.pipeline_mode<synchronous>, transform_indices = @transform_6, window_bounds = array<i64: 1, 32>}, {transform_indices = @transform_7, window_bounds = array<i64: 256, 32>}]} {
    %c0 = arith.constant 0 : index
    %c0_0 = arith.constant 0 : index
    %0 = vector.load %arg2[%c0, %c0_0] : memref<4x128xbf16, #tpu.memory_space<vmem>>, vector<4x128xbf16>
    %c0_1 = arith.constant 0 : index
    %c0_2 = arith.constant 0 : index
    %1 = vector.load %arg3[%c0_1, %c0_2] : memref<1x128xf32, #tpu.memory_space<vmem>>, vector<1x128xf32>
    %c0_3 = arith.constant 0 : index
    %c0_4 = arith.constant 0 : index
    %2 = vector.load %arg4[%c0_3, %c0_4] : memref<128x128xbf16, #tpu.memory_space<vmem>>, vector<128x128xbf16>
    %c0_5 = arith.constant 0 : index
    %c0_6 = arith.constant 0 : index
    %3 = vector.load %arg5[%c0_5, %c0_6] : memref<1x128xf32, #tpu.memory_space<vmem>>, vector<1x128xf32>
    %c0_7 = arith.constant 0 : index
    %c0_8 = arith.constant 0 : index
    %4 = vector.load %arg6[%c0_7, %c0_8] : memref<128x32xbf16, #tpu.memory_space<vmem>>, vector<128x32xbf16>
    %c0_9 = arith.constant 0 : index
    %c0_10 = arith.constant 0 : index
    %5 = vector.load %arg7[%c0_9, %c0_10] : memref<1x32xf32, #tpu.memory_space<vmem>>, vector<1x32xf32>
    %c0_i32 = arith.constant 0 : i32
    %c128_i32 = arith.constant 128 : i32
    %6 = arith.muli %c0_i32, %c128_i32 : i32
    %7 = tpu.assume_multiple %6, 128 : i32
    %8 = arith.index_cast %7 : i32 to index
    %c0_11 = arith.constant 0 : index
    %9 = vector.load %arg1[%8, %c0_11] : memref<256x4xbf16, #tpu.memory_space<vmem>>, vector<128x4xbf16>
    %cst = arith.constant dense<0.000000e+00> : vector<128x128xf32>
    %10 = tpu.matmul %9, %0, %cst {dimension_numbers = #tpu.dot_dimension_numbers<[1], [0], [0], [1], [0, 0, 1, 1], [], []>} : vector<128x4xbf16>, vector<4x128xbf16>, vector<128x128xf32> -> vector<128x128xf32>
    %11 = vector.broadcast %1 : vector<1x128xf32> to vector<128x128xf32>
    %12 = arith.addf %10, %11 : vector<128x128xf32>
    %cst_12 = arith.constant 5.000000e-01 : f32
    %13 = vector.broadcast %cst_12 : f32 to vector<128x128xf32>
    %14 = arith.mulf %13, %12 : vector<128x128xf32>
    %cst_13 = arith.constant 0.707106769 : f32
    %15 = vector.broadcast %cst_13 : f32 to vector<128x128xf32>
    %16 = arith.mulf %12, %15 : vector<128x128xf32>
    %17 = math.erf %16 : vector<128x128xf32>
    %cst_14 = arith.constant 1.000000e+00 : f32
    %18 = vector.broadcast %cst_14 : f32 to vector<128x128xf32>
    %19 = arith.addf %18, %17 : vector<128x128xf32>
    %20 = arith.mulf %14, %19 : vector<128x128xf32>
    %21 = arith.truncf %20 : vector<128x128xf32> to vector<128x128xbf16>
    %cst_15 = arith.constant dense<0.000000e+00> : vector<128x128xf32>
    %22 = tpu.matmul %21, %2, %cst_15 {dimension_numbers = #tpu.dot_dimension_numbers<[1], [0], [0], [1], [0, 0, 1, 1], [], []>} : vector<128x128xbf16>, vector<128x128xbf16>, vector<128x128xf32> -> vector<128x128xf32>
    %23 = vector.broadcast %3 : vector<1x128xf32> to vector<128x128xf32>
    %24 = arith.addf %22, %23 : vector<128x128xf32>
    %cst_16 = arith.constant 5.000000e-01 : f32
    %25 = vector.broadcast %cst_16 : f32 to vector<128x128xf32>
    %26 = arith.mulf %25, %24 : vector<128x128xf32>
    %cst_17 = arith.constant 0.707106769 : f32
    %27 = vector.broadcast %cst_17 : f32 to vector<128x128xf32>
    %28 = arith.mulf %24, %27 : vector<128x128xf32>
    %29 = math.erf %28 : vector<128x128xf32>
    %cst_18 = arith.constant 1.000000e+00 : f32
    %30 = vector.broadcast %cst_18 : f32 to vector<128x128xf32>
    %31 = arith.addf %30, %29 : vector<128x128xf32>
    %32 = arith.mulf %26, %31 : vector<128x128xf32>
    %33 = arith.truncf %32 : vector<128x128xf32> to vector<128x128xbf16>
    %cst_19 = arith.constant dense<0.000000e+00> : vector<128x32xf32>
    %34 = tpu.matmul %33, %4, %cst_19 {dimension_numbers = #tpu.dot_dimension_numbers<[1], [0], [0], [1], [0, 0, 1, 1], [], []>} : vector<128x128xbf16>, vector<128x32xbf16>, vector<128x32xf32> -> vector<128x32xf32>
    %35 = vector.broadcast %5 : vector<1x32xf32> to vector<128x32xf32>
    %36 = arith.addf %34, %35 : vector<128x32xf32>
    %37 = arith.index_cast %7 : i32 to index
    %c0_20 = arith.constant 0 : index
    %38 = vector.load %arg8[%37, %c0_20] : memref<256x32xf32, #tpu.memory_space<vmem>>, vector<128x32xf32>
    tpu.vector_store %arg8[%37, %c0_20], %36 {strides = array<i32>} : memref<256x32xf32, #tpu.memory_space<vmem>>, vector<128x32xf32>,
    %c1_i32 = arith.constant 1 : i32
    %c128_i32_21 = arith.constant 128 : i32
    %39 = arith.muli %c1_i32, %c128_i32_21 : i32
    %40 = tpu.assume_multiple %39, 128 : i32
    %41 = arith.index_cast %40 : i32 to index
    %c0_22 = arith.constant 0 : index
    %42 = vector.load %arg1[%41, %c0_22] : memref<256x4xbf16, #tpu.memory_space<vmem>>, vector<128x4xbf16>
    %cst_23 = arith.constant dense<0.000000e+00> : vector<128x128xf32>
    %43 = tpu.matmul %42, %0, %cst_23 {dimension_numbers = #tpu.dot_dimension_numbers<[1], [0], [0], [1], [0, 0, 1, 1], [], []>} : vector<128x4xbf16>, vector<4x128xbf16>, vector<128x128xf32> -> vector<128x128xf32>
    %44 = vector.broadcast %1 : vector<1x128xf32> to vector<128x128xf32>
    %45 = arith.addf %43, %44 : vector<128x128xf32>
    %cst_24 = arith.constant 5.000000e-01 : f32
    %46 = vector.broadcast %cst_24 : f32 to vector<128x128xf32>
    %47 = arith.mulf %46, %45 : vector<128x128xf32>
    %cst_25 = arith.constant 0.707106769 : f32
    %48 = vector.broadcast %cst_25 : f32 to vector<128x128xf32>
    %49 = arith.mulf %45, %48 : vector<128x128xf32>
    %50 = math.erf %49 : vector<128x128xf32>
    %cst_26 = arith.constant 1.000000e+00 : f32
    %51 = vector.broadcast %cst_26 : f32 to vector<128x128xf32>
    %52 = arith.addf %51, %50 : vector<128x128xf32>
    %53 = arith.mulf %47, %52 : vector<128x128xf32>
    %54 = arith.truncf %53 : vector<128x128xf32> to vector<128x128xbf16>
    %cst_27 = arith.constant dense<0.000000e+00> : vector<128x128xf32>
    %55 = tpu.matmul %54, %2, %cst_27 {dimension_numbers = #tpu.dot_dimension_numbers<[1], [0], [0], [1], [0, 0, 1, 1], [], []>} : vector<128x128xbf16>, vector<128x128xbf16>, vector<128x128xf32> -> vector<128x128xf32>
    %56 = vector.broadcast %3 : vector<1x128xf32> to vector<128x128xf32>
    %57 = arith.addf %55, %56 : vector<128x128xf32>
    %cst_28 = arith.constant 5.000000e-01 : f32
    %58 = vector.broadcast %cst_28 : f32 to vector<128x128xf32>
    %59 = arith.mulf %58, %57 : vector<128x128xf32>
    %cst_29 = arith.constant 0.707106769 : f32
    %60 = vector.broadcast %cst_29 : f32 to vector<128x128xf32>
    %61 = arith.mulf %57, %60 : vector<128x128xf32>
    %62 = math.erf %61 : vector<128x128xf32>
    %cst_30 = arith.constant 1.000000e+00 : f32
    %63 = vector.broadcast %cst_30 : f32 to vector<128x128xf32>
    %64 = arith.addf %63, %62 : vector<128x128xf32>
    %65 = arith.mulf %59, %64 : vector<128x128xf32>
    %66 = arith.truncf %65 : vector<128x128xf32> to vector<128x128xbf16>
    %cst_31 = arith.constant dense<0.000000e+00> : vector<128x32xf32>
    %67 = tpu.matmul %66, %4, %cst_31 {dimension_numbers = #tpu.dot_dimension_numbers<[1], [0], [0], [1], [0, 0, 1, 1], [], []>} : vector<128x128xbf16>, vector<128x32xbf16>, vector<128x32xf32> -> vector<128x32xf32>
    %68 = vector.broadcast %5 : vector<1x32xf32> to vector<128x32xf32>
    %69 = arith.addf %67, %68 : vector<128x32xf32>
    %70 = arith.index_cast %40 : i32 to index
    %c0_32 = arith.constant 0 : index
    %71 = vector.load %arg8[%70, %c0_32] : memref<256x32xf32, #tpu.memory_space<vmem>>, vector<128x32xf32>
    tpu.vector_store %arg8[%70, %c0_32], %69 {strides = array<i32>} : memref<256x32xf32, #tpu.memory_space<vmem>>, vector<128x32xf32>,
    %c2_i32 = arith.constant 2 : i32
    return
  }
  func.func @transform_0(%arg0: i32) -> (i32, i32) {
    %c0_i32 = arith.constant 0 : i32
    %c0_i32_0 = arith.constant 0 : i32
    return %arg0, %c0_i32 : i32, i32
  }
  func.func @transform_1(%arg0: i32) -> (i32, i32) {
    %c0_i32 = arith.constant 0 : i32
    %c0_i32_0 = arith.constant 0 : i32
    %c0_i32_1 = arith.constant 0 : i32
    return %c0_i32, %c0_i32_0 : i32, i32
  }
  func.func @transform_2(%arg0: i32) -> (i32, i32) {
    %c0_i32 = arith.constant 0 : i32
    %c0_i32_0 = arith.constant 0 : i32
    %c0_i32_1 = arith.constant 0 : i32
    return %c0_i32, %c0_i32_0 : i32, i32
  }
  func.func @transform_3(%arg0: i32) -> (i32, i32) {
    %c0_i32 = arith.constant 0 : i32
    %c0_i32_0 = arith.constant 0 : i32
    %c0_i32_1 = arith.constant 0 : i32
    return %c0_i32, %c0_i32_0 : i32, i32
  }
  func.func @transform_4(%arg0: i32) -> (i32, i32) {
    %c0_i32 = arith.constant 0 : i32
    %c0_i32_0 = arith.constant 0 : i32
    %c0_i32_1 = arith.constant 0 : i32
    return %c0_i32, %c0_i32_0 : i32, i32
  }
  func.func @transform_5(%arg0: i32) -> (i32, i32) {
    %c0_i32 = arith.constant 0 : i32
    %c0_i32_0 = arith.constant 0 : i32
    %c0_i32_1 = arith.constant 0 : i32
    return %c0_i32, %c0_i32_0 : i32, i32
  }
  func.func @transform_6(%arg0: i32) -> (i32, i32) {
    %c0_i32 = arith.constant 0 : i32
    %c0_i32_0 = arith.constant 0 : i32
    %c0_i32_1 = arith.constant 0 : i32
    return %c0_i32, %c0_i32_0 : i32, i32
  }
  func.func @transform_7(%arg0: i32) -> (i32, i32) {
    %c0_i32 = arith.constant 0 : i32
    %c0_i32_0 = arith.constant 0 : i32
    return %arg0, %c0_i32 : i32, i32
  }
}

</mosaic_0001>

<llo_original>
// kernel: tpu_custom_call.1
$region0: #{tpu_custom_call.1}
  #allocation0 [shape = 'u32[]', space=smem, size = 0x4, offset = 0x4, fixed_abs, tag = 'smem constant byte address 0x4 - core index']
  #allocation1 [shape = 'u32[144,128]{1,0:T(1,128)}', space=vmem, size = 0x12000, scoped, tag = 'internal scratch']
  %s0 = inlined_call_operand.vmem [shape: bf16[512,4], index: 0, kind: input, shape index: {}]
  %s1 = inlined_call_operand.vmem [shape: bf16[4,128], index: 1, kind: input, shape index: {}]
  %s2 = inlined_call_operand.vmem [shape: f32[1,128], index: 2, kind: input, shape index: {}]
  %s3 = inlined_call_operand.vmem [shape: bf16[128,128], index: 3, kind: input, shape index: {}]
  %s4 = inlined_call_operand.vmem [shape: f32[1,128], index: 4, kind: input, shape index: {}]
  %s5 = inlined_call_operand.vmem [shape: bf16[128,32], index: 5, kind: input, shape index: {}]
  %s6 = inlined_call_operand.vmem [shape: f32[1,32], index: 6, kind: input, shape index: {}]
  %s7 = inlined_call_operand.vmem [shape: f32[512,32], index: 7, kind: output, shape index: {}]
  %s8 = sld [smem:[#allocation0]]
  $region61: #{tpu_custom_call.1} parent=0
    _
  %s10 = ssub.s32 1, %s8
  %s11 = scalar_select 0, %s10, %s8
  loop: start=0, step=1, limit=4
  $region2: #{tpu_custom_call.1} parent=0 // loop_pre_header
    _
  $region3: #{tpu_custom_call.1} parent=0 // loop_header
    %s13 = sphi 0, %s17
    %p14 = scmp.ge.s32.totalorder %s13, 4
    %s23 = sphi 0, %s25
    %s26 = sphi 0, %s23
    %s27 = sphi 0, %s26
    %s43 = sphi 0, %s27
    %s47 = sphi 0, %s47
    %s49 = sphi 0, %s47
    %s50 = sphi 0, %s49
    %s64 = sphi 0, %s50
    %s68 = sphi 0, %s68
    %s70 = sphi 0, %s68
    %s71 = sphi 0, %s70
    %s85 = sphi 0, %s71
    %s89 = sphi 0, %s89
    %s91 = sphi 0, %s89
    %s92 = sphi 0, %s91
    %s106 = sphi 0, %s92
    %s110 = sphi 0, %s110
    %s112 = sphi 0, %s110
    %s113 = sphi 0, %s112
    %s127 = sphi 0, %s113
    %s131 = sphi 0, %s131
    %s133 = sphi 0, %s131
    %s134 = sphi 0, %s133
    %s148 = sphi 0, %s134
    %s152 = sphi 0, %s152
    %s154 = sphi 0, %s152
    %s155 = sphi 0, %s154
    %s169 = sphi 0, %s155
    %s175 = sphi 0, %s177
    %s178 = sphi 0, %s175
    %s179 = sphi 0, %s178
    %s195 = sphi 0, %s179
  $region4: #{tpu_custom_call.1} parent=0 // loop_header_branch
    %16 = sbr.rel (%p14) target = $region8
  $region5: #{tpu_custom_call.1} parent=0 // loop_body
    %s18 = ssub.s32 %s13, 1
    %s19 = ssub.s32 %s13, 2
    %s20 = sadd.s32 %s13, 1
    %s21 = ssub.s32 %s13, %s20
    %p22 = scmp.eq.s32.totalorder %s21, 0
    %s24 = sadd.s32 %s23, 1
    %s25 = scalar_select %p22, %s23, %s24
    %p28 = pneg %p22
    %p29 = scmp.eq.s32.totalorder %s13, 1
    %p30 = por %p28, %p29
    %p31 = scmp.ne.s32.totalorder %s23, %s26
    %p32 = scmp.eq.s32.totalorder %s13, 0
    %p33 = por %p31, %p32
    %p34 = scmp.ne.s32.totalorder %s23, %s26
    %p35 = scmp.eq.s32.totalorder %s18, 1
    %p36 = por %p34, %p35
    %p37 = scmp.ne.s32.totalorder %s26, %s27
    %p38 = scmp.eq.s32.totalorder %s18, 0
    %p39 = por %p37, %p38
    %p40 = scmp.ne.s32.totalorder %s26, %s27
    %p41 = scmp.eq.s32.totalorder %s19, 1
    %p42 = por %p40, %p41
    %p44 = scmp.ne.s32.totalorder %s27, %s43
    %p45 = scmp.eq.s32.totalorder %s19, 0
    %p46 = por %p44, %p45
    %s48 = sadd.s32 %s47, 1
    %p51 = scmp.eq.s32.totalorder %s13, 1
    %p52 = scmp.ne.s32.totalorder %s47, %s49
    %p53 = scmp.eq.s32.totalorder %s13, 0
    %p54 = por %p52, %p53
    %p55 = scmp.ne.s32.totalorder %s47, %s49
    %p56 = scmp.eq.s32.totalorder %s18, 1
    %p57 = por %p55, %p56
    %p58 = scmp.ne.s32.totalorder %s49, %s50
    %p59 = scmp.eq.s32.totalorder %s18, 0
    %p60 = por %p58, %p59
    %p61 = scmp.ne.s32.totalorder %s49, %s50
    %p62 = scmp.eq.s32.totalorder %s19, 1
    %p63 = por %p61, %p62
    %p65 = scmp.ne.s32.totalorder %s50, %s64
    %p66 = scmp.eq.s32.totalorder %s19, 0
    %p67 = por %p65, %p66
    %s69 = sadd.s32 %s68, 1
    %p72 = scmp.eq.s32.totalorder %s13, 1
    %p73 = scmp.ne.s32.totalorder %s68, %s70
    %p74 = scmp.eq.s32.totalorder %s13, 0
    %p75 = por %p73, %p74
    %p76 = scmp.ne.s32.totalorder %s68, %s70
    %p77 = scmp.eq.s32.totalorder %s18, 1
    %p78 = por %p76, %p77
    %p79 = scmp.ne.s32.totalorder %s70, %s71
    %p80 = scmp.eq.s32.totalorder %s18, 0
    %p81 = por %p79, %p80
    %p82 = scmp.ne.s32.totalorder %s70, %s71
    %p83 = scmp.eq.s32.totalorder %s19, 1
    %p84 = por %p82, %p83
    %p86 = scmp.ne.s32.totalorder %s71, %s85
    %p87 = scmp.eq.s32.totalorder %s19, 0
    %p88 = por %p86, %p87
    %s90 = sadd.s32 %s89, 1
    %p93 = scmp.eq.s32.totalorder %s13, 1
    %p94 = scmp.ne.s32.totalorder %s89, %s91
    %p95 = scmp.eq.s32.totalorder %s13, 0
    %p96 = por %p94, %p95
    %p97 = scmp.ne.s32.totalorder %s89, %s91
    %p98 = scmp.eq.s32.totalorder %s18, 1
    %p99 = por %p97, %p98
    %p100 = scmp.ne.s32.totalorder %s91, %s92
    %p101 = scmp.eq.s32.totalorder %s18, 0
    %p102 = por %p100, %p101
    %p103 = scmp.ne.s32.totalorder %s91, %s92
    %p104 = scmp.eq.s32.totalorder %s19, 1
    %p105 = por %p103, %p104
    %p107 = scmp.ne.s32.totalorder %s92, %s106
    %p108 = scmp.eq.s32.totalorder %s19, 0
    %p109 = por %p107, %p108
    %s111 = sadd.s32 %s110, 1
    %p114 = scmp.eq.s32.totalorder %s13, 1
    %p115 = scmp.ne.s32.totalorder %s110, %s112
    %p116 = scmp.eq.s32.totalorder %s13, 0
    %p117 = por %p115, %p116
    %p118 = scmp.ne.s32.totalorder %s110, %s112
    %p119 = scmp.eq.s32.totalorder %s18, 1
    %p120 = por %p118, %p119
    %p121 = scmp.ne.s32.totalorder %s112, %s113
    %p122 = scmp.eq.s32.totalorder %s18, 0
    %p123 = por %p121, %p122
    %p124 = scmp.ne.s32.totalorder %s112, %s113
    %p125 = scmp.eq.s32.totalorder %s19, 1
    %p126 = por %p124, %p125
    %p128 = scmp.ne.s32.totalorder %s113, %s127
    %p129 = scmp.eq.s32.totalorder %s19, 0
    %p130 = por %p128, %p129
    %s132 = sadd.s32 %s131, 1
    %p135 = scmp.eq.s32.totalorder %s13, 1
    %p136 = scmp.ne.s32.totalorder %s131, %s133
    %p137 = scmp.eq.s32.totalorder %s13, 0
    %p138 = por %p136, %p137
    %p139 = scmp.ne.s32.totalorder %s131, %s133
    %p140 = scmp.eq.s32.totalorder %s18, 1
    %p141 = por %p139, %p140
    %p142 = scmp.ne.s32.totalorder %s133, %s134
    %p143 = scmp.eq.s32.totalorder %s18, 0
    %p144 = por %p142, %p143
    %p145 = scmp.ne.s32.totalorder %s133, %s134
    %p146 = scmp.eq.s32.totalorder %s19, 1
    %p147 = por %p145, %p146
    %p149 = scmp.ne.s32.totalorder %s134, %s148
    %p150 = scmp.eq.s32.totalorder %s19, 0
    %p151 = por %p149, %p150
    %s153 = sadd.s32 %s152, 1
    %p156 = scmp.eq.s32.totalorder %s13, 1
    %p157 = scmp.ne.s32.totalorder %s152, %s154
    %p158 = scmp.eq.s32.totalorder %s13, 0
    %p159 = por %p157, %p158
    %p160 = scmp.ne.s32.totalorder %s152, %s154
    %p161 = scmp.eq.s32.totalorder %s18, 1
    %p162 = por %p160, %p161
    %p163 = scmp.ne.s32.totalorder %s154, %s155
    %p164 = scmp.eq.s32.totalorder %s18, 0
    %p165 = por %p163, %p164
    %p166 = scmp.ne.s32.totalorder %s154, %s155
    %p167 = scmp.eq.s32.totalorder %s19, 1
    %p168 = por %p166, %p167
    %p170 = scmp.ne.s32.totalorder %s155, %s169
    %p171 = scmp.eq.s32.totalorder %s19, 0
    %p172 = por %p170, %p171
    %s173 = ssub.s32 %s13, %s20
    %p174 = scmp.eq.s32.totalorder %s173, 0
    %s176 = sadd.s32 %s175, 1
    %s177 = scalar_select %p174, %s175, %s176
    %p180 = pneg %p174
    %p181 = scmp.eq.s32.totalorder %s13, 1
    %p182 = por %p180, %p181
    %p183 = scmp.ne.s32.totalorder %s175, %s178
    %p184 = scmp.eq.s32.totalorder %s13, 0
    %p185 = por %p183, %p184
    %p186 = scmp.ne.s32.totalorder %s175, %s178
    %p187 = scmp.eq.s32.totalorder %s18, 1
    %p188 = por %p186, %p187
    %p189 = scmp.ne.s32.totalorder %s178, %s179
    %p190 = scmp.eq.s32.totalorder %s18, 0
    %p191 = por %p189, %p190
    %p192 = scmp.ne.s32.totalorder %s178, %s179
    %p193 = scmp.eq.s32.totalorder %s19, 1
    %p194 = por %p192, %p193
    %p196 = scmp.ne.s32.totalorder %s179, %s195
    %p197 = scmp.eq.s32.totalorder %s19, 0
    %p198 = por %p196, %p197
    %p199 = scmp.le.s32.totalorder 1, %s13
    %p200 = scmp.lt.s32.totalorder %s13, 3
    %p201 = pnand %p199, %p200
    %p202 = pneg %p201
    // Predicated region
    $region9: #{tpu_custom_call.1} parent=5 // pred_check
      _
    $region10: #{tpu_custom_call.1} parent=5 // pred_check_branch
      %204 = sbr.rel (%p201) target = $region12
    $region11: #{tpu_custom_call.1} parent=5 // pred_region
      %s205 = ssub.s32 %s13, 1
      // Predicated region
      $region13: #{tpu_custom_call.1} parent=11 // pred_check
        %p206 = pneg %p60
      $region14: #{tpu_custom_call.1} parent=11 // pred_check_branch
        %208 = sbr.rel (%p206) target = $region16
      $region15: #{tpu_custom_call.1} parent=11 // pred_region
        _
      $region16: #{tpu_custom_call.1} parent=11 // pred_fallthru
        _
      // Predicated region
      $region17: #{tpu_custom_call.1} parent=11 // pred_check
        %p209 = pneg %p81
      $region18: #{tpu_custom_call.1} parent=11 // pred_check_branch
        %211 = sbr.rel (%p209) target = $region20
      $region19: #{tpu_custom_call.1} parent=11 // pred_region
        _
      $region20: #{tpu_custom_call.1} parent=11 // pred_fallthru
        _
      // Predicated region
      $region21: #{tpu_custom_call.1} parent=11 // pred_check
        %p212 = pneg %p102
      $region22: #{tpu_custom_call.1} parent=11 // pred_check_branch
        %214 = sbr.rel (%p212) target = $region24
      $region23: #{tpu_custom_call.1} parent=11 // pred_region
        _
      $region24: #{tpu_custom_call.1} parent=11 // pred_fallthru
        _
      // Predicated region
      $region25: #{tpu_custom_call.1} parent=11 // pred_check
        %p215 = pneg %p123
      $region26: #{tpu_custom_call.1} parent=11 // pred_check_branch
        %217 = sbr.rel (%p215) target = $region28
      $region27: #{tpu_custom_call.1} parent=11 // pred_region
        _
      $region28: #{tpu_custom_call.1} parent=11 // pred_fallthru
        _
      // Predicated region
      $region29: #{tpu_custom_call.1} parent=11 // pred_check
        %p218 = pneg %p144
      $region30: #{tpu_custom_call.1} parent=11 // pred_check_branch
        %220 = sbr.rel (%p218) target = $region32
      $region31: #{tpu_custom_call.1} parent=11 // pred_region
        _
      $region32: #{tpu_custom_call.1} parent=11 // pred_fallthru
        _
      // Predicated region
      $region33: #{tpu_custom_call.1} parent=11 // pred_check
        %p221 = pneg %p165
      $region34: #{tpu_custom_call.1} parent=11 // pred_check_branch
        %223 = sbr.rel (%p221) target = $region36
      $region35: #{tpu_custom_call.1} parent=11 // pred_region
        _
      $region36: #{tpu_custom_call.1} parent=11 // pred_fallthru
        _
    $region12: #{tpu_custom_call.1} parent=5 // pred_fallthru
      _
    %p224 = scmp.lt.s32.totalorder %s13, 2
    // Predicated region
    $region37: #{tpu_custom_call.1} parent=5 // pred_check
      %p225 = pneg %p224
    $region38: #{tpu_custom_call.1} parent=5 // pred_check_branch
      %227 = sbr.rel (%p225) target = $region40
    $region39: #{tpu_custom_call.1} parent=5 // pred_region
      // Predicated region
      $region41: #{tpu_custom_call.1} parent=39 // pred_check
        %p228 = pneg %p33
      $region42: #{tpu_custom_call.1} parent=39 // pred_check_branch
        %230 = sbr.rel (%p228) target = $region44
      $region43: #{tpu_custom_call.1} parent=39 // pred_region
        %s231 = smul.u32 32, %s13
        %p232 = scmp.lt.s32.totalorder %s231, 63
        %s233 = scalar_select %p232, %s231, 63
        %s234 = smul.addr %s233, 4
        %s235 = scalar_lea.vmem %s0, %s234
        %s236 = smul.u32 32, %s13
      $region44: #{tpu_custom_call.1} parent=39 // pred_fallthru
        _
    $region40: #{tpu_custom_call.1} parent=5 // pred_fallthru
      _
    %p237 = scmp.le.s32.totalorder 1, %s13
    %p238 = scmp.lt.s32.totalorder %s13, 3
    %p239 = pnand %p237, %p238
    %p240 = pneg %p239
    // Predicated region
    $region45: #{tpu_custom_call.1} parent=5 // pred_check
      _
    $region46: #{tpu_custom_call.1} parent=5 // pred_check_branch
      %242 = sbr.rel (%p239) target = $region48
    $region47: #{tpu_custom_call.1} parent=5 // pred_region
      %s243 = ssub.s32 %s13, 1
      %s244 = smul.u32 32, %s18
      %p245 = scmp.lt.s32.totalorder %s244, 63
      %s246 = scalar_select %p245, %s244, 63
      %s247 = smul.addr %s246, 4
      %s248 = scalar_lea.vmem %s0, %s247
      %p249 = pneg %p39
      %p250 = pneg %p36
      %p251 = pneg %p60
      %p252 = pneg %p57
      %p253 = pneg %p81
      %p254 = pneg %p78
      %p255 = pneg %p102
      %p256 = pneg %p99
      %p257 = pneg %p123
      %p258 = pneg %p120
      %p259 = pneg %p144
      %p260 = pneg %p141
      %p261 = pneg %p165
      %p262 = pneg %p162
      %p263 = pneg %p191
      %p264 = pneg %p188
      %s265 = smul.u32 32, %s18
      %p266 = scmp.lt.s32.totalorder %s265, 63
      %s267 = scalar_select %p266, %s265, 63
      %s268 = smul.addr %s267, 8
      %s269 = scalar_lea.vmem %s7, %s268
      %s270 = smul.u32 32, %s18
      %p271 = scmp.lt.s32.totalorder %s270, 63
      %s272 = scalar_select %p271, %s270, 63
      %s273 = smul.addr %s272, 4
      %s274 = scalar_lea.vmem %s0, %s273
      %s275 = smul.u32 32, %s18
      %s276 = smul.u32 32, %s18
      %p277 = scmp.lt.s32.totalorder %s276, 63
      %s278 = scalar_select %p277, %s276, 63
      %s279 = smul.addr %s278, 8
      %s280 = scalar_lea.vmem %s7, %s279
      %s281 = smul.u32 32, %s18
      %v283 = vld [vmem:[%s1] sm:$0x3]
      %v284 = vld [vmem:[%s2] sm:$0x1]
      %v285 = vld [vmem:[%s3] sm:$0xf]
      %v286 = vld [vmem:[%s3 + $0x4] sm:$0xf]
      %v287 = vld [vmem:[%s3 + $0x8] sm:$0xf]
      %v288 = vld [vmem:[%s3 + $0xc] sm:$0xf]
      %v289 = vld [vmem:[%s3 + $0x10] sm:$0xf]
      %v290 = vld [vmem:[%s3 + $0x14] sm:$0xf]
      %v291 = vld [vmem:[%s3 + $0x18] sm:$0xf]
      %v292 = vld [vmem:[%s3 + $0x1c] sm:$0xf]
      %v293 = vld [vmem:[%s3 + $0x20] sm:$0xf]
      %v294 = vld [vmem:[%s3 + $0x24] sm:$0xf]
      %v295 = vld [vmem:[%s3 + $0x28] sm:$0xf]
      %v296 = vld [vmem:[%s3 + $0x2c] sm:$0xf]
      %v297 = vld [vmem:[%s3 + $0x30] sm:$0xf]
      %v298 = vld [vmem:[%s3 + $0x34] sm:$0xf]
      %v299 = vld [vmem:[%s3 + $0x38] sm:$0xf]
      %v300 = vld [vmem:[%s3 + $0x3c] sm:$0xf]
      %v301 = vld [vmem:[%s4] sm:$0x1]
      %v302 = vld [vmem:[%s5] sm:$0xf]
      %v303 = vld [vmem:[%s5 + $0x4] sm:$0xf]
      %v304 = vld [vmem:[%s5 + $0x8] sm:$0xf]
      %v305 = vld [vmem:[%s5 + $0xc] sm:$0xf]
      %v306 = vld [vmem:[%s5 + $0x10] sm:$0xf]
      %v307 = vld [vmem:[%s5 + $0x14] sm:$0xf]
      %v308 = vld [vmem:[%s5 + $0x18] sm:$0xf]
      %v309 = vld [vmem:[%s5 + $0x1c] sm:$0xf]
      %v310 = vld [vmem:[%s5 + $0x20] sm:$0xf]
      %v311 = vld [vmem:[%s5 + $0x24] sm:$0xf]
      %v312 = vld [vmem:[%s5 + $0x28] sm:$0xf]
      %v313 = vld [vmem:[%s5 + $0x2c] sm:$0xf]
      %v314 = vld [vmem:[%s5 + $0x30] sm:$0xf]
      %v315 = vld [vmem:[%s5 + $0x34] sm:$0xf]
      %v316 = vld [vmem:[%s5 + $0x38] sm:$0xf]
      %v317 = vld [vmem:[%s5 + $0x3c] sm:$0xf]
      %v318 = vld [vmem:[%s6] sm:$0x1]
      %v319 = vld [vmem:[%s274] sm:$0xf]
      %v320 = vld [vmem:[%s274 + $0x4] sm:$0xf]
      %v321 = vld [vmem:[%s274 + $0x8] sm:$0xf]
      %v322 = vld [vmem:[%s274 + $0xc] sm:$0xf]
      %v323 = vld [vmem:[%s274 + $0x10] sm:$0xf]
      %v324 = vld [vmem:[%s274 + $0x14] sm:$0xf]
      %v325 = vld [vmem:[%s274 + $0x18] sm:$0xf]
      %v326 = vld [vmem:[%s274 + $0x1c] sm:$0xf]
      %v327 = vld [vmem:[%s274 + $0x20] sm:$0xf]
      %v328 = vld [vmem:[%s274 + $0x24] sm:$0xf]
      %v329 = vld [vmem:[%s274 + $0x28] sm:$0xf]
      %v330 = vld [vmem:[%s274 + $0x2c] sm:$0xf]
      %v331 = vld [vmem:[%s274 + $0x30] sm:$0xf]
      %v332 = vld [vmem:[%s274 + $0x34] sm:$0xf]
      %v333 = vld [vmem:[%s274 + $0x38] sm:$0xf]
      %v334 = vld [vmem:[%s274 + $0x3c] sm:$0xf]
      %v336 = vlaneseq
      %v337 = vshrl.u32 %v336, 7
      %v338 = vsub.s32 0, %v337
      %v339 = vrot.slane %v284, %v338
      %v357 = vunpack.c.l.b16 %v319
      %v358 = vunpack.c.l.b16 %v320
      %v359 = vunpack.c.l.b16 %v321
      %v360 = vunpack.c.l.b16 %v322
      %v361 = vunpack.c.l.b16 %v323
      %v362 = vunpack.c.l.b16 %v324
      %v363 = vunpack.c.l.b16 %v325
      %v364 = vunpack.c.l.b16 %v326
      %v365 = vunpack.c.l.b16 %v327
      %v366 = vunpack.c.l.b16 %v328
      %v367 = vunpack.c.l.b16 %v329
      %v368 = vunpack.c.l.b16 %v330
      %v369 = vunpack.c.l.b16 %v331
      %v370 = vunpack.c.l.b16 %v332
      %v371 = vunpack.c.l.b16 %v333
      %v372 = vunpack.c.l.b16 %v334
      %v373 = vpack.c.b16 %v358, %v357
      %v374 = vpack.c.b16 %v360, %v359
      %v375 = vpack.c.b16 %v362, %v361
      %v376 = vpack.c.b16 %v364, %v363
      %v377 = vpack.c.b16 %v366, %v365
      %v378 = vpack.c.b16 %v368, %v367
      %v379 = vpack.c.b16 %v370, %v369
      %v380 = vpack.c.b16 %v372, %v371
      %vm381 = vcmask 31744
      %v383 = vsel %vm381, %v373, 0
      %v386 = vsel %vm381, %v374, 0
      %v389 = vsel %vm381, %v375, 0
      %v392 = vsel %vm381, %v376, 0
      %v395 = vsel %vm381, %v377, 0
      %v398 = vsel %vm381, %v378, 0
      %v401 = vsel %vm381, %v379, 0
      %v404 = vsel %vm381, %v380, 0
      %vm406 = vcmask 1041408
      %v408 = vsel %vm406, %v283, 0
      %410 = vmatprep.subr.bf16.mxu0 0
      %411 = vmatpush1.bf16.msra.mxu0 %v408
      %412 = vmatprep.subr.bf16.mxu0 0
      %413 = vmatpush1.bf16.msra.mxu0 0
      %414 = vmatprep.subr.bf16.mxu0 0
      %415 = vmatpush1.bf16.msra.mxu0 0
      %416 = vmatprep.subr.bf16.mxu0 0
      %417 = vmatpush1.bf16.msra.mxu0 0
      %418 = vmatprep.subr.bf16.mxu0 0
      %419 = vmatpush1.bf16.msra.mxu0 0
      %420 = vmatprep.subr.bf16.mxu0 0
      %421 = vmatpush1.bf16.msra.mxu0 0
      %422 = vmatprep.subr.bf16.mxu0 0
      %423 = vmatpush1.bf16.msra.mxu0 0
      %424 = vmatprep.subr.bf16.mxu0 0
      %425 = vmatpush1.bf16.msra.mxu0 0
      %426 = vmatprep.subr.bf16.mxu0 0
      %427 = vmatpush1.bf16.msra.mxu0 0
      %428 = vmatprep.subr.bf16.mxu0 0
      %429 = vmatpush1.bf16.msra.mxu0 0
      %430 = vmatprep.subr.bf16.mxu0 0
      %431 = vmatpush1.bf16.msra.mxu0 0
      %432 = vmatprep.subr.bf16.mxu0 0
      %433 = vmatpush1.bf16.msra.mxu0 0
      %434 = vmatprep.subr.bf16.mxu0 0
      %435 = vmatpush1.bf16.msra.mxu0 0
      %436 = vmatprep.subr.bf16.mxu0 0
      %437 = vmatpush1.bf16.msra.mxu0 0
      %438 = vmatprep.subr.bf16.mxu0 0
      %439 = vmatpush1.bf16.msra.mxu0 0
      %440 = vmatprep.subr.bf16.mxu0 0
      %441 = vmatpush1.bf16.msra.mxu0 0
      %442 = vmatprep.mubr.bf16.mxu0 0
      %443 = vmatmul.mubr.bf16.gmra.mrb[0].mxu0 %v383
      %v444 = vpop.f32.mrb[0].mxu0
      %v445 = vadd.f32 %v339, %v444
      %v446 = vpop.f32.mrb[0].mxu0
      %v447 = vpop.f32.mrb[0].mxu0
      %v448 = vadd.f32 %v339, %v447
      %v449 = vpop.f32.mrb[0].mxu0
      %450 = vmatprep.mubr.bf16.mxu0 0
      %451 = vmatmul.mubr.bf16.gmra.mrb[0].mxu0 %v386
      %v452 = vpop.f32.mrb[0].mxu0
      %v453 = vadd.f32 %v339, %v452
      %v454 = vpop.f32.mrb[0].mxu0
      %v455 = vpop.f32.mrb[0].mxu0
      %v456 = vadd.f32 %v339, %v455
      %v457 = vpop.f32.mrb[0].mxu0
      %458 = vmatprep.mubr.bf16.mxu0 0
      %459 = vmatmul.mubr.bf16.gmra.mrb[0].mxu0 %v389
      %v460 = vpop.f32.mrb[0].mxu0
      %v461 = vadd.f32 %v339, %v460
      %v462 = vpop.f32.mrb[0].mxu0
      %v463 = vpop.f32.mrb[0].mxu0
      %v464 = vadd.f32 %v339, %v463
      %v465 = vpop.f32.mrb[0].mxu0
      %466 = vmatprep.mubr.bf16.mxu0 0
      %467 = vmatmul.mubr.bf16.gmra.mrb[0].mxu0 %v392
      %v468 = vpop.f32.mrb[0].mxu0
      %v469 = vadd.f32 %v339, %v468
      %v470 = vpop.f32.mrb[0].mxu0
      %v471 = vpop.f32.mrb[0].mxu0
      %v472 = vadd.f32 %v339, %v471
      %v473 = vpop.f32.mrb[0].mxu0
      %474 = vmatprep.mubr.bf16.mxu0 0
      %475 = vmatmul.mubr.bf16.gmra.mrb[0].mxu0 %v395
      %v476 = vpop.f32.mrb[0].mxu0
      %v477 = vadd.f32 %v339, %v476
      %v478 = vpop.f32.mrb[0].mxu0
      %v479 = vpop.f32.mrb[0].mxu0
      %v480 = vadd.f32 %v339, %v479
      %v481 = vpop.f32.mrb[0].mxu0
      %482 = vmatprep.mubr.bf16.mxu0 0
      %483 = vmatmul.mubr.bf16.gmra.mrb[0].mxu0 %v398
      %v484 = vpop.f32.mrb[0].mxu0
      %v485 = vadd.f32 %v339, %v484
      %v486 = vpop.f32.mrb[0].mxu0
      %v487 = vpop.f32.mrb[0].mxu0
      %v488 = vadd.f32 %v339, %v487
      %v489 = vpop.f32.mrb[0].mxu0
      %490 = vmatprep.mubr.bf16.mxu0 0
      %491 = vmatmul.mubr.bf16.gmra.mrb[0].mxu0 %v401
      %v492 = vpop.f32.mrb[0].mxu0
      %v493 = vadd.f32 %v339, %v492
      %v494 = vpop.f32.mrb[0].mxu0
      %v495 = vpop.f32.mrb[0].mxu0
      %v496 = vadd.f32 %v339, %v495
      %v497 = vpop.f32.mrb[0].mxu0
      %498 = vmatprep.mubr.bf16.mxu0 0
      %499 = vmatmul.mubr.bf16.gmra.mrb[0].mxu0 %v404
      %v500 = vpop.f32.mrb[0].mxu0
      %v501 = vadd.f32 %v339, %v500
      %v502 = vpop.f32.mrb[0].mxu0
      %v503 = vpop.f32.mrb[0].mxu0
      %v504 = vadd.f32 %v339, %v503
      %v505 = vpop.f32.mrb[0].mxu0
      %506 = vdwg.mxu0
      %v507 = vmul.f32 %v445, 0.5
      %v508 = vmul.f32 %v448, 0.5
      %v509 = vmul.f32 %v453, 0.5
      %v510 = vmul.f32 %v456, 0.5
      %v511 = vmul.f32 %v461, 0.5
      %v512 = vmul.f32 %v464, 0.5
      %v513 = vmul.f32 %v469, 0.5
      %v514 = vmul.f32 %v472, 0.5
      %v515 = vmul.f32 %v477, 0.5
      %v516 = vmul.f32 %v480, 0.5
      %v517 = vmul.f32 %v485, 0.5
      %v518 = vmul.f32 %v488, 0.5
      %v519 = vmul.f32 %v493, 0.5
      %v520 = vmul.f32 %v496, 0.5
      %v521 = vmul.f32 %v501, 0.5
      %v522 = vmul.f32 %v504, 0.5
      %v523 = vmul.f32 %v445, 0.70710677
      %v524 = vmul.f32 %v448, 0.70710677
      %v525 = vmul.f32 %v453, 0.70710677
      %v526 = vmul.f32 %v456, 0.70710677
      %v527 = vmul.f32 %v461, 0.70710677
      %v528 = vmul.f32 %v464, 0.70710677
      %v529 = vmul.f32 %v469, 0.70710677
      %v530 = vmul.f32 %v472, 0.70710677
      %v531 = vmul.f32 %v477, 0.70710677
      %v532 = vmul.f32 %v480, 0.70710677
      %v533 = vmul.f32 %v485, 0.70710677
      %v534 = vmul.f32 %v488, 0.70710677
      %v535 = vmul.f32 %v493, 0.70710677
      %v536 = vmul.f32 %v496, 0.70710677
      %v537 = vmul.f32 %v501, 0.70710677
      %v538 = vmul.f32 %v504, 0.70710677
      %v539 = verf.f32.pop %v523
      %v540 = verf.f32.pop %v524
      %v541 = verf.f32.pop %v525
      %v542 = verf.f32.pop %v526
      %v543 = verf.f32.pop %v527
      %v544 = verf.f32.pop %v528
      %v545 = verf.f32.pop %v529
      %v546 = verf.f32.pop %v530
      %v547 = verf.f32.pop %v531
      %v548 = verf.f32.pop %v532
      %v549 = verf.f32.pop %v533
      %v550 = verf.f32.pop %v534
      %v551 = verf.f32.pop %v535
      %v552 = verf.f32.pop %v536
      %v553 = verf.f32.pop %v537
      %v554 = verf.f32.pop %v538
      %v555 = vadd.f32 %v539, 1.0
      %v556 = vadd.f32 %v540, 1.0
      %v557 = vadd.f32 %v541, 1.0
      %v558 = vadd.f32 %v542, 1.0
      %v559 = vadd.f32 %v543, 1.0
      %v560 = vadd.f32 %v544, 1.0
      %v561 = vadd.f32 %v545, 1.0
      %v562 = vadd.f32 %v546, 1.0
      %v563 = vadd.f32 %v547, 1.0
      %v564 = vadd.f32 %v548, 1.0
      %v565 = vadd.f32 %v549, 1.0
      %v566 = vadd.f32 %v550, 1.0
      %v567 = vadd.f32 %v551, 1.0
      %v568 = vadd.f32 %v552, 1.0
      %v569 = vadd.f32 %v553, 1.0
      %v570 = vadd.f32 %v554, 1.0
      %v571 = vmul.f32 %v507, %v555
      %v572 = vmul.f32 %v508, %v556
      %v573 = vmul.f32 %v509, %v557
      %v574 = vmul.f32 %v510, %v558
      %v575 = vmul.f32 %v511, %v559
      %v576 = vmul.f32 %v512, %v560
      %v577 = vmul.f32 %v513, %v561
      %v578 = vmul.f32 %v514, %v562
      %v579 = vmul.f32 %v515, %v563
      %v580 = vmul.f32 %v516, %v564
      %v581 = vmul.f32 %v517, %v565
      %v582 = vmul.f32 %v518, %v566
      %v583 = vmul.f32 %v519, %v567
      %v584 = vmul.f32 %v520, %v568
      %v585 = vmul.f32 %v521, %v569
      %v586 = vmul.f32 %v522, %v570
      %v587 = vpack.c.bf16 %v572, %v571
      %v588 = vpack.c.bf16 %v574, %v573
      %v589 = vpack.c.bf16 %v576, %v575
      %v590 = vpack.c.bf16 %v578, %v577
      %v591 = vpack.c.bf16 %v580, %v579
      %v592 = vpack.c.bf16 %v582, %v581
      %v593 = vpack.c.bf16 %v584, %v583
      %v594 = vpack.c.bf16 %v586, %v585
      %v596 = vlaneseq
      %v597 = vshrl.u32 %v596, 7
      %v598 = vsub.s32 0, %v597
      %v599 = vrot.slane %v301, %v598
      %v617 = vunpack.c.l.b16 %v285
      %v618 = vunpack.c.l.b16 %v286
      %v619 = vunpack.c.l.b16 %v287
      %v620 = vunpack.c.l.b16 %v288
      %v621 = vunpack.c.l.b16 %v289
      %v622 = vunpack.c.l.b16 %v290
      %v623 = vunpack.c.l.b16 %v291
      %v624 = vunpack.c.l.b16 %v292
      %v625 = vunpack.c.l.b16 %v293
      %v626 = vunpack.c.l.b16 %v294
      %v627 = vunpack.c.l.b16 %v295
      %v628 = vunpack.c.l.b16 %v296
      %v629 = vunpack.c.l.b16 %v297
      %v630 = vunpack.c.l.b16 %v298
      %v631 = vunpack.c.l.b16 %v299
      %v632 = vunpack.c.l.b16 %v300
      %v633 = vpack.c.b16 %v618, %v617
      %v634 = vpack.c.b16 %v620, %v619
      %v635 = vpack.c.b16 %v622, %v621
      %v636 = vpack.c.b16 %v624, %v623
      %v637 = vpack.c.b16 %v626, %v625
      %v638 = vpack.c.b16 %v628, %v627
      %v639 = vpack.c.b16 %v630, %v629
      %v640 = vpack.c.b16 %v632, %v631
      %649 = vmatprep.subr.bf16.mxu0 0
      %650 = vmatpush1.bf16.msra.mxu0 %v633
      %651 = vmatprep.subr.bf16.mxu0 0
      %652 = vmatpush1.bf16.msra.mxu0 %v634
      %653 = vmatprep.subr.bf16.mxu0 0
      %654 = vmatpush1.bf16.msra.mxu0 %v635
      %655 = vmatprep.subr.bf16.mxu0 0
      %656 = vmatpush1.bf16.msra.mxu0 %v636
      %657 = vmatprep.subr.bf16.mxu0 0
      %658 = vmatpush1.bf16.msra.mxu0 %v637
      %659 = vmatprep.subr.bf16.mxu0 0
      %660 = vmatpush1.bf16.msra.mxu0 %v638
      %661 = vmatprep.subr.bf16.mxu0 0
      %662 = vmatpush1.bf16.msra.mxu0 %v639
      %663 = vmatprep.subr.bf16.mxu0 0
      %664 = vmatpush1.bf16.msra.mxu0 %v640
      %665 = vmatprep.subr.bf16.mxu0 0
      %666 = vmatpush1.bf16.msra.mxu0 0
      %667 = vmatprep.subr.bf16.mxu0 0
      %668 = vmatpush1.bf16.msra.mxu0 0
      %669 = vmatprep.subr.bf16.mxu0 0
      %670 = vmatpush1.bf16.msra.mxu0 0
      %671 = vmatprep.subr.bf16.mxu0 0
      %672 = vmatpush1.bf16.msra.mxu0 0
      %673 = vmatprep.subr.bf16.mxu0 0
      %674 = vmatpush1.bf16.msra.mxu0 0
      %675 = vmatprep.subr.bf16.mxu0 0
      %676 = vmatpush1.bf16.msra.mxu0 0
      %677 = vmatprep.subr.bf16.mxu0 0
      %678 = vmatpush1.bf16.msra.mxu0 0
      %679 = vmatprep.subr.bf16.mxu0 0
      %680 = vmatpush1.bf16.msra.mxu0 0
      %681 = vmatprep.mubr.bf16.mxu0 0
      %682 = vmatmul.mubr.bf16.gmra.mrb[0].mxu0 %v587
      %v683 = vpop.f32.mrb[0].mxu0
      %v684 = vadd.f32 %v599, %v683
      %v685 = vpop.f32.mrb[0].mxu0
      %v686 = vpop.f32.mrb[0].mxu0
      %v687 = vadd.f32 %v599, %v686
      %v688 = vpop.f32.mrb[0].mxu0
      %689 = vmatprep.mubr.bf16.mxu0 0
      %690 = vmatmul.mubr.bf16.gmra.mrb[0].mxu0 %v588
      %v691 = vpop.f32.mrb[0].mxu0
      %v692 = vadd.f32 %v599, %v691
      %v693 = vpop.f32.mrb[0].mxu0
      %v694 = vpop.f32.mrb[0].mxu0
      %v695 = vadd.f32 %v599, %v694
      %v696 = vpop.f32.mrb[0].mxu0
      %697 = vmatprep.mubr.bf16.mxu0 0
      %698 = vmatmul.mubr.bf16.gmra.mrb[0].mxu0 %v589
      %v699 = vpop.f32.mrb[0].mxu0
      %v700 = vadd.f32 %v599, %v699
      %v701 = vpop.f32.mrb[0].mxu0
      %v702 = vpop.f32.mrb[0].mxu0
      %v703 = vadd.f32 %v599, %v702
      %v704 = vpop.f32.mrb[0].mxu0
      %705 = vmatprep.mubr.bf16.mxu0 0
      %706 = vmatmul.mubr.bf16.gmra.mrb[0].mxu0 %v590
      %v707 = vpop.f32.mrb[0].mxu0
      %v708 = vadd.f32 %v599, %v707
      %v709 = vpop.f32.mrb[0].mxu0
      %v710 = vpop.f32.mrb[0].mxu0
      %v711 = vadd.f32 %v599, %v710
      %v712 = vpop.f32.mrb[0].mxu0
      %713 = vmatprep.mubr.bf16.mxu0 0
      %714 = vmatmul.mubr.bf16.gmra.mrb[0].mxu0 %v591
      %v715 = vpop.f32.mrb[0].mxu0
      %v716 = vadd.f32 %v599, %v715
      %v717 = vpop.f32.mrb[0].mxu0
      %v718 = vpop.f32.mrb[0].mxu0
      %v719 = vadd.f32 %v599, %v718
      %v720 = vpop.f32.mrb[0].mxu0
      %721 = vmatprep.mubr.bf16.mxu0 0
      %722 = vmatmul.mubr.bf16.gmra.mrb[0].mxu0 %v592
      %v723 = vpop.f32.mrb[0].mxu0
      %v724 = vadd.f32 %v599, %v723
      %v725 = vpop.f32.mrb[0].mxu0
      %v726 = vpop.f32.mrb[0].mxu0
      %v727 = vadd.f32 %v599, %v726
      %v728 = vpop.f32.mrb[0].mxu0
      %729 = vmatprep.mubr.bf16.mxu0 0
      %730 = vmatmul.mubr.bf16.gmra.mrb[0].mxu0 %v593
      %v731 = vpop.f32.mrb[0].mxu0
      %v732 = vadd.f32 %v599, %v731
      %v733 = vpop.f32.mrb[0].mxu0
      %v734 = vpop.f32.mrb[0].mxu0
      %v735 = vadd.f32 %v599, %v734
      %v736 = vpop.f32.mrb[0].mxu0
      %737 = vmatprep.mubr.bf16.mxu0 0
      %738 = vmatmul.mubr.bf16.gmra.mrb[0].mxu0 %v594
      %v739 = vpop.f32.mrb[0].mxu0
      %v740 = vadd.f32 %v599, %v739
      %v741 = vpop.f32.mrb[0].mxu0
      %v742 = vpop.f32.mrb[0].mxu0
      %v743 = vadd.f32 %v599, %v742
      %v744 = vpop.f32.mrb[0].mxu0
      %745 = vdwg.mxu0
      %v746 = vmul.f32 %v684, 0.5
      %v747 = vmul.f32 %v687, 0.5
      %v748 = vmul.f32 %v692, 0.5
      %v749 = vmul.f32 %v695, 0.5
      %v750 = vmul.f32 %v700, 0.5
      %v751 = vmul.f32 %v703, 0.5
      %v752 = vmul.f32 %v708, 0.5
      %v753 = vmul.f32 %v711, 0.5
      %v754 = vmul.f32 %v716, 0.5
      %v755 = vmul.f32 %v719, 0.5
      %v756 = vmul.f32 %v724, 0.5
      %v757 = vmul.f32 %v727, 0.5
      %v758 = vmul.f32 %v732, 0.5
      %v759 = vmul.f32 %v735, 0.5
      %v760 = vmul.f32 %v740, 0.5
      %v761 = vmul.f32 %v743, 0.5
      %v762 = vmul.f32 %v684, 0.70710677
      %v763 = vmul.f32 %v687, 0.70710677
      %v764 = vmul.f32 %v692, 0.70710677
      %v765 = vmul.f32 %v695, 0.70710677
      %v766 = vmul.f32 %v700, 0.70710677
      %v767 = vmul.f32 %v703, 0.70710677
      %v768 = vmul.f32 %v708, 0.70710677
      %v769 = vmul.f32 %v711, 0.70710677
      %v770 = vmul.f32 %v716, 0.70710677
      %v771 = vmul.f32 %v719, 0.70710677
      %v772 = vmul.f32 %v724, 0.70710677
      %v773 = vmul.f32 %v727, 0.70710677
      %v774 = vmul.f32 %v732, 0.70710677
      %v775 = vmul.f32 %v735, 0.70710677
      %v776 = vmul.f32 %v740, 0.70710677
      %v777 = vmul.f32 %v743, 0.70710677
      %v778 = verf.f32.pop %v762
      %v779 = verf.f32.pop %v763
      %v780 = verf.f32.pop %v764
      %v781 = verf.f32.pop %v765
      %v782 = verf.f32.pop %v766
      %v783 = verf.f32.pop %v767
      %v784 = verf.f32.pop %v768
      %v785 = verf.f32.pop %v769
      %v786 = verf.f32.pop %v770
      %v787 = verf.f32.pop %v771
      %v788 = verf.f32.pop %v772
      %v789 = verf.f32.pop %v773
      %v790 = verf.f32.pop %v774
      %v791 = verf.f32.pop %v775
      %v792 = verf.f32.pop %v776
      %v793 = verf.f32.pop %v777
      %v794 = vadd.f32 %v778, 1.0
      %v795 = vadd.f32 %v779, 1.0
      %v796 = vadd.f32 %v780, 1.0
      %v797 = vadd.f32 %v781, 1.0
      %v798 = vadd.f32 %v782, 1.0
      %v799 = vadd.f32 %v783, 1.0
      %v800 = vadd.f32 %v784, 1.0
      %v801 = vadd.f32 %v785, 1.0
      %v802 = vadd.f32 %v786, 1.0
      %v803 = vadd.f32 %v787, 1.0
      %v804 = vadd.f32 %v788, 1.0
      %v805 = vadd.f32 %v789, 1.0
      %v806 = vadd.f32 %v790, 1.0
      %v807 = vadd.f32 %v791, 1.0
      %v808 = vadd.f32 %v792, 1.0
      %v809 = vadd.f32 %v793, 1.0
      %v810 = vmul.f32 %v746, %v794
      %v811 = vmul.f32 %v747, %v795
      %v812 = vmul.f32 %v748, %v796
      %v813 = vmul.f32 %v749, %v797
      %v814 = vmul.f32 %v750, %v798
      %v815 = vmul.f32 %v751, %v799
      %v816 = vmul.f32 %v752, %v800
      %v817 = vmul.f32 %v753, %v801
      %v818 = vmul.f32 %v754, %v802
      %v819 = vmul.f32 %v755, %v803
      %v820 = vmul.f32 %v756, %v804
      %v821 = vmul.f32 %v757, %v805
      %v822 = vmul.f32 %v758, %v806
      %v823 = vmul.f32 %v759, %v807
      %v824 = vmul.f32 %v760, %v808
      %v825 = vmul.f32 %v761, %v809
      %v826 = vpack.c.bf16 %v811, %v810
      %v827 = vpack.c.bf16 %v813, %v812
      %v828 = vpack.c.bf16 %v815, %v814
      %v829 = vpack.c.bf16 %v817, %v816
      %v830 = vpack.c.bf16 %v819, %v818
      %v831 = vpack.c.bf16 %v821, %v820
      %v832 = vpack.c.bf16 %v823, %v822
      %v833 = vpack.c.bf16 %v825, %v824
      %v835 = vlaneseq
      %v836 = vshrl.u32 %v835, 7
      %v837 = vsub.s32 0, %v836
      %v838 = vrot.slane %v318, %v837
      %v856 = vunpack.c.l.b16 %v302
      %v857 = vunpack.c.l.b16 %v303
      %v858 = vunpack.c.l.b16 %v304
      %v859 = vunpack.c.l.b16 %v305
      %v860 = vunpack.c.l.b16 %v306
      %v861 = vunpack.c.l.b16 %v307
      %v862 = vunpack.c.l.b16 %v308
      %v863 = vunpack.c.l.b16 %v309
      %v864 = vunpack.c.l.b16 %v310
      %v865 = vunpack.c.l.b16 %v311
      %v866 = vunpack.c.l.b16 %v312
      %v867 = vunpack.c.l.b16 %v313
      %v868 = vunpack.c.l.b16 %v314
      %v869 = vunpack.c.l.b16 %v315
      %v870 = vunpack.c.l.b16 %v316
      %v871 = vunpack.c.l.b16 %v317
      %v872 = vpack.c.b16 %v857, %v856
      %v873 = vpack.c.b16 %v859, %v858
      %v874 = vpack.c.b16 %v861, %v860
      %v875 = vpack.c.b16 %v863, %v862
      %v876 = vpack.c.b16 %v865, %v864
      %v877 = vpack.c.b16 %v867, %v866
      %v878 = vpack.c.b16 %v869, %v868
      %v879 = vpack.c.b16 %v871, %v870
      %888 = vmatprep.subr.bf16.mxu0 0
      %889 = vmatpush1.bf16.msra.mxu0 %v872
      %890 = vmatprep.subr.bf16.mxu0 0
      %891 = vmatpush1.bf16.msra.mxu0 %v873
      %892 = vmatprep.subr.bf16.mxu0 0
      %893 = vmatpush1.bf16.msra.mxu0 %v874
      %894 = vmatprep.subr.bf16.mxu0 0
      %895 = vmatpush1.bf16.msra.mxu0 %v875
      %896 = vmatprep.subr.bf16.mxu0 0
      %897 = vmatpush1.bf16.msra.mxu0 %v876
      %898 = vmatprep.subr.bf16.mxu0 0
      %899 = vmatpush1.bf16.msra.mxu0 %v877
      %900 = vmatprep.subr.bf16.mxu0 0
      %901 = vmatpush1.bf16.msra.mxu0 %v878
      %902 = vmatprep.subr.bf16.mxu0 0
      %903 = vmatpush1.bf16.msra.mxu0 %v879
      %904 = vmatprep.subr.bf16.mxu0 0
      %905 = vmatpush1.bf16.msra.mxu0 0
      %906 = vmatprep.subr.bf16.mxu0 0
      %907 = vmatpush1.bf16.msra.mxu0 0
      %908 = vmatprep.subr.bf16.mxu0 0
      %909 = vmatpush1.bf16.msra.mxu0 0
      %910 = vmatprep.subr.bf16.mxu0 0
      %911 = vmatpush1.bf16.msra.mxu0 0
      %912 = vmatprep.subr.bf16.mxu0 0
      %913 = vmatpush1.bf16.msra.mxu0 0
      %914 = vmatprep.subr.bf16.mxu0 0
      %915 = vmatpush1.bf16.msra.mxu0 0
      %916 = vmatprep.subr.bf16.mxu0 0
      %917 = vmatpush1.bf16.msra.mxu0 0
      %918 = vmatprep.subr.bf16.mxu0 0
      %919 = vmatpush1.bf16.msra.mxu0 0
      %920 = vmatprep.mubr.bf16.mxu0 0
      %921 = vmatmul.mubr.bf16.gmra.mrb[0].mxu0 %v826
      %v922 = vpop.f32.mrb[0].mxu0
      %v923 = vadd.f32 %v838, %v922
      %v924 = vpop.f32.mrb[0].mxu0
      %v925 = vpop.f32.mrb[0].mxu0
      %v926 = vadd.f32 %v838, %v925
      %v927 = vpop.f32.mrb[0].mxu0
      %928 = vmatprep.mubr.bf16.mxu0 0
      %929 = vmatmul.mubr.bf16.gmra.mrb[0].mxu0 %v827
      %v930 = vpop.f32.mrb[0].mxu0
      %v931 = vadd.f32 %v838, %v930
      %v932 = vpop.f32.mrb[0].mxu0
      %v933 = vpop.f32.mrb[0].mxu0
      %v934 = vadd.f32 %v838, %v933
      %v935 = vpop.f32.mrb[0].mxu0
      %936 = vmatprep.mubr.bf16.mxu0 0
      %937 = vmatmul.mubr.bf16.gmra.mrb[0].mxu0 %v828
      %v938 = vpop.f32.mrb[0].mxu0
      %v939 = vadd.f32 %v838, %v938
      %v940 = vpop.f32.mrb[0].mxu0
      %v941 = vpop.f32.mrb[0].mxu0
      %v942 = vadd.f32 %v838, %v941
      %v943 = vpop.f32.mrb[0].mxu0
      %944 = vmatprep.mubr.bf16.mxu0 0
      %945 = vmatmul.mubr.bf16.gmra.mrb[0].mxu0 %v829
      %v946 = vpop.f32.mrb[0].mxu0
      %v947 = vadd.f32 %v838, %v946
      %v948 = vpop.f32.mrb[0].mxu0
      %v949 = vpop.f32.mrb[0].mxu0
      %v950 = vadd.f32 %v838, %v949
      %v951 = vpop.f32.mrb[0].mxu0
      %952 = vmatprep.mubr.bf16.mxu0 0
      %953 = vmatmul.mubr.bf16.gmra.mrb[0].mxu0 %v830
      %v954 = vpop.f32.mrb[0].mxu0
      %v955 = vadd.f32 %v838, %v954
      %v956 = vpop.f32.mrb[0].mxu0
      %v957 = vpop.f32.mrb[0].mxu0
      %v958 = vadd.f32 %v838, %v957
      %v959 = vpop.f32.mrb[0].mxu0
      %960 = vmatprep.mubr.bf16.mxu0 0
      %961 = vmatmul.mubr.bf16.gmra.mrb[0].mxu0 %v831
      %v962 = vpop.f32.mrb[0].mxu0
      %v963 = vadd.f32 %v838, %v962
      %v964 = vpop.f32.mrb[0].mxu0
      %v965 = vpop.f32.mrb[0].mxu0
      %v966 = vadd.f32 %v838, %v965
      %v967 = vpop.f32.mrb[0].mxu0
      %968 = vmatprep.mubr.bf16.mxu0 0
      %969 = vmatmul.mubr.bf16.gmra.mrb[0].mxu0 %v832
      %v970 = vpop.f32.mrb[0].mxu0
      %v971 = vadd.f32 %v838, %v970
      %v972 = vpop.f32.mrb[0].mxu0
      %v973 = vpop.f32.mrb[0].mxu0
      %v974 = vadd.f32 %v838, %v973
      %v975 = vpop.f32.mrb[0].mxu0
      %976 = vmatprep.mubr.bf16.mxu0 0
      %977 = vmatmul.mubr.bf16.gmra.mrb[0].mxu0 %v833
      %v978 = vpop.f32.mrb[0].mxu0
      %v979 = vadd.f32 %v838, %v978
      %v980 = vpop.f32.mrb[0].mxu0
      %v981 = vpop.f32.mrb[0].mxu0
      %v982 = vadd.f32 %v838, %v981
      %v983 = vpop.f32.mrb[0].mxu0
      %984 = vdwg.mxu0
      %vm985 = vcmask 261120
      %986 = vst.msk [vmem:[%s280] sm:$0xff] %vm985, %v923
      %987 = vst.msk [vmem:[%s280 + $0x8] sm:$0xff] %vm985, %v926
      %988 = vst.msk [vmem:[%s280 + $0x10] sm:$0xff] %vm985, %v931
      %989 = vst.msk [vmem:[%s280 + $0x18] sm:$0xff] %vm985, %v934
      %990 = vst.msk [vmem:[%s280 + $0x20] sm:$0xff] %vm985, %v939
      %991 = vst.msk [vmem:[%s280 + $0x28] sm:$0xff] %vm985, %v942
      %992 = vst.msk [vmem:[%s280 + $0x30] sm:$0xff] %vm985, %v947
      %993 = vst.msk [vmem:[%s280 + $0x38] sm:$0xff] %vm985, %v950
      %994 = vst.msk [vmem:[%s280 + $0x40] sm:$0xff] %vm985, %v955
      %995 = vst.msk [vmem:[%s280 + $0x48] sm:$0xff] %vm985, %v958
      %996 = vst.msk [vmem:[%s280 + $0x50] sm:$0xff] %vm985, %v963
      %997 = vst.msk [vmem:[%s280 + $0x58] sm:$0xff] %vm985, %v966
      %998 = vst.msk [vmem:[%s280 + $0x60] sm:$0xff] %vm985, %v971
      %999 = vst.msk [vmem:[%s280 + $0x68] sm:$0xff] %vm985, %v974
      %1000 = vst.msk [vmem:[%s280 + $0x70] sm:$0xff] %vm985, %v979
      %1001 = vst.msk [vmem:[%s280 + $0x78] sm:$0xff] %vm985, %v982
      %s1002 = scalar_lea.vmem %s274, 64
      %v1003 = vld [vmem:[%s1002] sm:$0xf]
      %v1004 = vld [vmem:[%s1002 + $0x4] sm:$0xf]
      %v1005 = vld [vmem:[%s1002 + $0x8] sm:$0xf]
      %v1006 = vld [vmem:[%s1002 + $0xc] sm:$0xf]
      %v1007 = vld [vmem:[%s1002 + $0x10] sm:$0xf]
      %v1008 = vld [vmem:[%s1002 + $0x14] sm:$0xf]
      %v1009 = vld [vmem:[%s1002 + $0x18] sm:$0xf]
      %v1010 = vld [vmem:[%s1002 + $0x1c] sm:$0xf]
      %v1011 = vld [vmem:[%s1002 + $0x20] sm:$0xf]
      %v1012 = vld [vmem:[%s1002 + $0x24] sm:$0xf]
      %v1013 = vld [vmem:[%s1002 + $0x28] sm:$0xf]
      %v1014 = vld [vmem:[%s1002 + $0x2c] sm:$0xf]
      %v1015 = vld [vmem:[%s1002 + $0x30] sm:$0xf]
      %v1016 = vld [vmem:[%s1002 + $0x34] sm:$0xf]
      %v1017 = vld [vmem:[%s1002 + $0x38] sm:$0xf]
      %v1018 = vld [vmem:[%s1002 + $0x3c] sm:$0xf]
      %v1035 = vunpack.c.l.b16 %v1003
      %v1036 = vunpack.c.l.b16 %v1004
      %v1037 = vunpack.c.l.b16 %v1005
      %v1038 = vunpack.c.l.b16 %v1006
      %v1039 = vunpack.c.l.b16 %v1007
      %v1040 = vunpack.c.l.b16 %v1008
      %v1041 = vunpack.c.l.b16 %v1009
      %v1042 = vunpack.c.l.b16 %v1010
      %v1043 = vunpack.c.l.b16 %v1011
      %v1044 = vunpack.c.l.b16 %v1012
      %v1045 = vunpack.c.l.b16 %v1013
      %v1046 = vunpack.c.l.b16 %v1014
      %v1047 = vunpack.c.l.b16 %v1015
      %v1048 = vunpack.c.l.b16 %v1016
      %v1049 = vunpack.c.l.b16 %v1017
      %v1050 = vunpack.c.l.b16 %v1018
      %v1051 = vpack.c.b16 %v1036, %v1035
      %v1052 = vpack.c.b16 %v1038, %v1037
      %v1053 = vpack.c.b16 %v1040, %v1039
      %v1054 = vpack.c.b16 %v1042, %v1041
      %v1055 = vpack.c.b16 %v1044, %v1043
      %v1056 = vpack.c.b16 %v1046, %v1045
      %v1057 = vpack.c.b16 %v1048, %v1047
      %v1058 = vpack.c.b16 %v1050, %v1049
      %v1060 = vsel %vm381, %v1051, 0
      %v1063 = vsel %vm381, %v1052, 0
      %v1066 = vsel %vm381, %v1053, 0
      %v1069 = vsel %vm381, %v1054, 0
      %v1072 = vsel %vm381, %v1055, 0
      %v1075 = vsel %vm381, %v1056, 0
      %v1078 = vsel %vm381, %v1057, 0
      %v1081 = vsel %vm381, %v1058, 0
      %1083 = vmatprep.subr.bf16.mxu0 0
      %1084 = vmatpush1.bf16.msra.mxu0 %v408
      %1085 = vmatprep.subr.bf16.mxu0 0
      %1086 = vmatpush1.bf16.msra.mxu0 0
      %1087 = vmatprep.subr.bf16.mxu0 0
      %1088 = vmatpush1.bf16.msra.mxu0 0
      %1089 = vmatprep.subr.bf16.mxu0 0
      %1090 = vmatpush1.bf16.msra.mxu0 0
      %1091 = vmatprep.subr.bf16.mxu0 0
      %1092 = vmatpush1.bf16.msra.mxu0 0
      %1093 = vmatprep.subr.bf16.mxu0 0
      %1094 = vmatpush1.bf16.msra.mxu0 0
      %1095 = vmatprep.subr.bf16.mxu0 0
      %1096 = vmatpush1.bf16.msra.mxu0 0
      %1097 = vmatprep.subr.bf16.mxu0 0
      %1098 = vmatpush1.bf16.msra.mxu0 0
      %1099 = vmatprep.subr.bf16.mxu0 0
      %1100 = vmatpush1.bf16.msra.mxu0 0
      %1101 = vmatprep.subr.bf16.mxu0 0
      %1102 = vmatpush1.bf16.msra.mxu0 0
      %1103 = vmatprep.subr.bf16.mxu0 0
      %1104 = vmatpush1.bf16.msra.mxu0 0
      %1105 = vmatprep.subr.bf16.mxu0 0
      %1106 = vmatpush1.bf16.msra.mxu0 0
      %1107 = vmatprep.subr.bf16.mxu0 0
      %1108 = vmatpush1.bf16.msra.mxu0 0
      %1109 = vmatprep.subr.bf16.mxu0 0
      %1110 = vmatpush1.bf16.msra.mxu0 0
      %1111 = vmatprep.subr.bf16.mxu0 0
      %1112 = vmatpush1.bf16.msra.mxu0 0
      %1113 = vmatprep.subr.bf16.mxu0 0
      %1114 = vmatpush1.bf16.msra.mxu0 0
      %1115 = vmatprep.mubr.bf16.mxu0 0
      %1116 = vmatmul.mubr.bf16.gmra.mrb[0].mxu0 %v1060
      %v1117 = vpop.f32.mrb[0].mxu0
      %v1118 = vadd.f32 %v339, %v1117
      %v1119 = vpop.f32.mrb[0].mxu0
      %v1120 = vpop.f32.mrb[0].mxu0
      %v1121 = vadd.f32 %v339, %v1120
      %v1122 = vpop.f32.mrb[0].mxu0
      %1123 = vmatprep.mubr.bf16.mxu0 0
      %1124 = vmatmul.mubr.bf16.gmra.mrb[0].mxu0 %v1063
      %v1125 = vpop.f32.mrb[0].mxu0
      %v1126 = vadd.f32 %v339, %v1125
      %v1127 = vpop.f32.mrb[0].mxu0
      %v1128 = vpop.f32.mrb[0].mxu0
      %v1129 = vadd.f32 %v339, %v1128
      %v1130 = vpop.f32.mrb[0].mxu0
      %1131 = vmatprep.mubr.bf16.mxu0 0
      %1132 = vmatmul.mubr.bf16.gmra.mrb[0].mxu0 %v1066
      %v1133 = vpop.f32.mrb[0].mxu0
      %v1134 = vadd.f32 %v339, %v1133
      %v1135 = vpop.f32.mrb[0].mxu0
      %v1136 = vpop.f32.mrb[0].mxu0
      %v1137 = vadd.f32 %v339, %v1136
      %v1138 = vpop.f32.mrb[0].mxu0
      %1139 = vmatprep.mubr.bf16.mxu0 0
      %1140 = vmatmul.mubr.bf16.gmra.mrb[0].mxu0 %v1069
      %v1141 = vpop.f32.mrb[0].mxu0
      %v1142 = vadd.f32 %v339, %v1141
      %v1143 = vpop.f32.mrb[0].mxu0
      %v1144 = vpop.f32.mrb[0].mxu0
      %v1145 = vadd.f32 %v339, %v1144
      %v1146 = vpop.f32.mrb[0].mxu0
      %1147 = vmatprep.mubr.bf16.mxu0 0
      %1148 = vmatmul.mubr.bf16.gmra.mrb[0].mxu0 %v1072
      %v1149 = vpop.f32.mrb[0].mxu0
      %v1150 = vadd.f32 %v339, %v1149
      %v1151 = vpop.f32.mrb[0].mxu0
      %v1152 = vpop.f32.mrb[0].mxu0
      %v1153 = vadd.f32 %v339, %v1152
      %v1154 = vpop.f32.mrb[0].mxu0
      %1155 = vmatprep.mubr.bf16.mxu0 0
      %1156 = vmatmul.mubr.bf16.gmra.mrb[0].mxu0 %v1075
      %v1157 = vpop.f32.mrb[0].mxu0
      %v1158 = vadd.f32 %v339, %v1157
      %v1159 = vpop.f32.mrb[0].mxu0
      %v1160 = vpop.f32.mrb[0].mxu0
      %v1161 = vadd.f32 %v339, %v1160
      %v1162 = vpop.f32.mrb[0].mxu0
      %1163 = vmatprep.mubr.bf16.mxu0 0
      %1164 = vmatmul.mubr.bf16.gmra.mrb[0].mxu0 %v1078
      %v1165 = vpop.f32.mrb[0].mxu0
      %v1166 = vadd.f32 %v339, %v1165
      %v1167 = vpop.f32.mrb[0].mxu0
      %v1168 = vpop.f32.mrb[0].mxu0
      %v1169 = vadd.f32 %v339, %v1168
      %v1170 = vpop.f32.mrb[0].mxu0
      %1171 = vmatprep.mubr.bf16.mxu0 0
      %1172 = vmatmul.mubr.bf16.gmra.mrb[0].mxu0 %v1081
      %v1173 = vpop.f32.mrb[0].mxu0
      %v1174 = vadd.f32 %v339, %v1173
      %v1175 = vpop.f32.mrb[0].mxu0
      %v1176 = vpop.f32.mrb[0].mxu0
      %v1177 = vadd.f32 %v339, %v1176
      %v1178 = vpop.f32.mrb[0].mxu0
      %1179 = vdwg.mxu0
      %v1180 = vmul.f32 %v1118, 0.5
      %v1181 = vmul.f32 %v1121, 0.5
      %v1182 = vmul.f32 %v1126, 0.5
      %v1183 = vmul.f32 %v1129, 0.5
      %v1184 = vmul.f32 %v1134, 0.5
      %v1185 = vmul.f32 %v1137, 0.5
      %v1186 = vmul.f32 %v1142, 0.5
      %v1187 = vmul.f32 %v1145, 0.5
      %v1188 = vmul.f32 %v1150, 0.5
      %v1189 = vmul.f32 %v1153, 0.5
      %v1190 = vmul.f32 %v1158, 0.5
      %v1191 = vmul.f32 %v1161, 0.5
      %v1192 = vmul.f32 %v1166, 0.5
      %v1193 = vmul.f32 %v1169, 0.5
      %v1194 = vmul.f32 %v1174, 0.5
      %v1195 = vmul.f32 %v1177, 0.5
      %v1196 = vmul.f32 %v1118, 0.70710677
      %v1197 = vmul.f32 %v1121, 0.70710677
      %v1198 = vmul.f32 %v1126, 0.70710677
      %v1199 = vmul.f32 %v1129, 0.70710677
      %v1200 = vmul.f32 %v1134, 0.70710677
      %v1201 = vmul.f32 %v1137, 0.70710677
      %v1202 = vmul.f32 %v1142, 0.70710677
      %v1203 = vmul.f32 %v1145, 0.70710677
      %v1204 = vmul.f32 %v1150, 0.70710677
      %v1205 = vmul.f32 %v1153, 0.70710677
      %v1206 = vmul.f32 %v1158, 0.70710677
      %v1207 = vmul.f32 %v1161, 0.70710677
      %v1208 = vmul.f32 %v1166, 0.70710677
      %v1209 = vmul.f32 %v1169, 0.70710677
      %v1210 = vmul.f32 %v1174, 0.70710677
      %v1211 = vmul.f32 %v1177, 0.70710677
      %v1212 = verf.f32.pop %v1196
      %v1213 = verf.f32.pop %v1197
      %v1214 = verf.f32.pop %v1198
      %v1215 = verf.f32.pop %v1199
      %v1216 = verf.f32.pop %v1200
      %v1217 = verf.f32.pop %v1201
      %v1218 = verf.f32.pop %v1202
      %v1219 = verf.f32.pop %v1203
      %v1220 = verf.f32.pop %v1204
      %v1221 = verf.f32.pop %v1205
      %v1222 = verf.f32.pop %v1206
      %v1223 = verf.f32.pop %v1207
      %v1224 = verf.f32.pop %v1208
      %v1225 = verf.f32.pop %v1209
      %v1226 = verf.f32.pop %v1210
      %v1227 = verf.f32.pop %v1211
      %v1228 = vadd.f32 %v1212, 1.0
      %v1229 = vadd.f32 %v1213, 1.0
      %v1230 = vadd.f32 %v1214, 1.0
      %v1231 = vadd.f32 %v1215, 1.0
      %v1232 = vadd.f32 %v1216, 1.0
      %v1233 = vadd.f32 %v1217, 1.0
      %v1234 = vadd.f32 %v1218, 1.0
      %v1235 = vadd.f32 %v1219, 1.0
      %v1236 = vadd.f32 %v1220, 1.0
      %v1237 = vadd.f32 %v1221, 1.0
      %v1238 = vadd.f32 %v1222, 1.0
      %v1239 = vadd.f32 %v1223, 1.0
      %v1240 = vadd.f32 %v1224, 1.0
      %v1241 = vadd.f32 %v1225, 1.0
      %v1242 = vadd.f32 %v1226, 1.0
      %v1243 = vadd.f32 %v1227, 1.0
      %v1244 = vmul.f32 %v1180, %v1228
      %v1245 = vmul.f32 %v1181, %v1229
      %v1246 = vmul.f32 %v1182, %v1230
      %v1247 = vmul.f32 %v1183, %v1231
      %v1248 = vmul.f32 %v1184, %v1232
      %v1249 = vmul.f32 %v1185, %v1233
      %v1250 = vmul.f32 %v1186, %v1234
      %v1251 = vmul.f32 %v1187, %v1235
      %v1252 = vmul.f32 %v1188, %v1236
      %v1253 = vmul.f32 %v1189, %v1237
      %v1254 = vmul.f32 %v1190, %v1238
      %v1255 = vmul.f32 %v1191, %v1239
      %v1256 = vmul.f32 %v1192, %v1240
      %v1257 = vmul.f32 %v1193, %v1241
      %v1258 = vmul.f32 %v1194, %v1242
      %v1259 = vmul.f32 %v1195, %v1243
      %v1260 = vpack.c.bf16 %v1245, %v1244
      %v1261 = vpack.c.bf16 %v1247, %v1246
      %v1262 = vpack.c.bf16 %v1249, %v1248
      %v1263 = vpack.c.bf16 %v1251, %v1250
      %v1264 = vpack.c.bf16 %v1253, %v1252
      %v1265 = vpack.c.bf16 %v1255, %v1254
      %v1266 = vpack.c.bf16 %v1257, %v1256
      %v1267 = vpack.c.bf16 %v1259, %v1258
      %1268 = vmatprep.subr.bf16.mxu0 0
      %1269 = vmatpush1.bf16.msra.mxu0 %v633
      %1270 = vmatprep.subr.bf16.mxu0 0
      %1271 = vmatpush1.bf16.msra.mxu0 %v634
      %1272 = vmatprep.subr.bf16.mxu0 0
      %1273 = vmatpush1.bf16.msra.mxu0 %v635
      %1274 = vmatprep.subr.bf16.mxu0 0
      %1275 = vmatpush1.bf16.msra.mxu0 %v636
      %1276 = vmatprep.subr.bf16.mxu0 0
      %1277 = vmatpush1.bf16.msra.mxu0 %v637
      %1278 = vmatprep.subr.bf16.mxu0 0
      %1279 = vmatpush1.bf16.msra.mxu0 %v638
      %1280 = vmatprep.subr.bf16.mxu0 0
      %1281 = vmatpush1.bf16.msra.mxu0 %v639
      %1282 = vmatprep.subr.bf16.mxu0 0
      %1283 = vmatpush1.bf16.msra.mxu0 %v640
      %1284 = vmatprep.subr.bf16.mxu0 0
      %1285 = vmatpush1.bf16.msra.mxu0 0
      %1286 = vmatprep.subr.bf16.mxu0 0
      %1287 = vmatpush1.bf16.msra.mxu0 0
      %1288 = vmatprep.subr.bf16.mxu0 0
      %1289 = vmatpush1.bf16.msra.mxu0 0
      %1290 = vmatprep.subr.bf16.mxu0 0
      %1291 = vmatpush1.bf16.msra.mxu0 0
      %1292 = vmatprep.subr.bf16.mxu0 0
      %1293 = vmatpush1.bf16.msra.mxu0 0
      %1294 = vmatprep.subr.bf16.mxu0 0
      %1295 = vmatpush1.bf16.msra.mxu0 0
      %1296 = vmatprep.subr.bf16.mxu0 0
      %1297 = vmatpush1.bf16.msra.mxu0 0
      %1298 = vmatprep.subr.bf16.mxu0 0
      %1299 = vmatpush1.bf16.msra.mxu0 0
      %1300 = vmatprep.mubr.bf16.mxu0 0
      %1301 = vmatmul.mubr.bf16.gmra.mrb[0].mxu0 %v1260
      %v1302 = vpop.f32.mrb[0].mxu0
      %v1303 = vadd.f32 %v599, %v1302
      %v1304 = vpop.f32.mrb[0].mxu0
      %v1305 = vpop.f32.mrb[0].mxu0
      %v1306 = vadd.f32 %v599, %v1305
      %v1307 = vpop.f32.mrb[0].mxu0
      %1308 = vmatprep.mubr.bf16.mxu0 0
      %1309 = vmatmul.mubr.bf16.gmra.mrb[0].mxu0 %v1261
      %v1310 = vpop.f32.mrb[0].mxu0
      %v1311 = vadd.f32 %v599, %v1310
      %v1312 = vpop.f32.mrb[0].mxu0
      %v1313 = vpop.f32.mrb[0].mxu0
      %v1314 = vadd.f32 %v599, %v1313
      %v1315 = vpop.f32.mrb[0].mxu0
      %1316 = vmatprep.mubr.bf16.mxu0 0
      %1317 = vmatmul.mubr.bf16.gmra.mrb[0].mxu0 %v1262
      %v1318 = vpop.f32.mrb[0].mxu0
      %v1319 = vadd.f32 %v599, %v1318
      %v1320 = vpop.f32.mrb[0].mxu0
      %v1321 = vpop.f32.mrb[0].mxu0
      %v1322 = vadd.f32 %v599, %v1321
      %v1323 = vpop.f32.mrb[0].mxu0
      %1324 = vmatprep.mubr.bf16.mxu0 0
      %1325 = vmatmul.mubr.bf16.gmra.mrb[0].mxu0 %v1263
      %v1326 = vpop.f32.mrb[0].mxu0
      %v1327 = vadd.f32 %v599, %v1326
      %v1328 = vpop.f32.mrb[0].mxu0
      %v1329 = vpop.f32.mrb[0].mxu0
      %v1330 = vadd.f32 %v599, %v1329
      %v1331 = vpop.f32.mrb[0].mxu0
      %1332 = vmatprep.mubr.bf16.mxu0 0
      %1333 = vmatmul.mubr.bf16.gmra.mrb[0].mxu0 %v1264
      %v1334 = vpop.f32.mrb[0].mxu0
      %v1335 = vadd.f32 %v599, %v1334
      %v1336 = vpop.f32.mrb[0].mxu0
      %v1337 = vpop.f32.mrb[0].mxu0
      %v1338 = vadd.f32 %v599, %v1337
      %v1339 = vpop.f32.mrb[0].mxu0
      %1340 = vmatprep.mubr.bf16.mxu0 0
      %1341 = vmatmul.mubr.bf16.gmra.mrb[0].mxu0 %v1265
      %v1342 = vpop.f32.mrb[0].mxu0
      %v1343 = vadd.f32 %v599, %v1342
      %v1344 = vpop.f32.mrb[0].mxu0
      %v1345 = vpop.f32.mrb[0].mxu0
      %v1346 = vadd.f32 %v599, %v1345
      %v1347 = vpop.f32.mrb[0].mxu0
      %1348 = vmatprep.mubr.bf16.mxu0 0
      %1349 = vmatmul.mubr.bf16.gmra.mrb[0].mxu0 %v1266
      %v1350 = vpop.f32.mrb[0].mxu0
      %v1351 = vadd.f32 %v599, %v1350
      %v1352 = vpop.f32.mrb[0].mxu0
      %v1353 = vpop.f32.mrb[0].mxu0
      %v1354 = vadd.f32 %v599, %v1353
      %v1355 = vpop.f32.mrb[0].mxu0
      %1356 = vmatprep.mubr.bf16.mxu0 0
      %1357 = vmatmul.mubr.bf16.gmra.mrb[0].mxu0 %v1267
      %v1358 = vpop.f32.mrb[0].mxu0
      %v1359 = vadd.f32 %v599, %v1358
      %v1360 = vpop.f32.mrb[0].mxu0
      %v1361 = vpop.f32.mrb[0].mxu0
      %v1362 = vadd.f32 %v599, %v1361
      %v1363 = vpop.f32.mrb[0].mxu0
      %1364 = vdwg.mxu0
      %v1365 = vmul.f32 %v1303, 0.5
      %v1366 = vmul.f32 %v1306, 0.5
      %v1367 = vmul.f32 %v1311, 0.5
      %v1368 = vmul.f32 %v1314, 0.5
      %v1369 = vmul.f32 %v1319, 0.5
      %v1370 = vmul.f32 %v1322, 0.5
      %v1371 = vmul.f32 %v1327, 0.5
      %v1372 = vmul.f32 %v1330, 0.5
      %v1373 = vmul.f32 %v1335, 0.5
      %v1374 = vmul.f32 %v1338, 0.5
      %v1375 = vmul.f32 %v1343, 0.5
      %v1376 = vmul.f32 %v1346, 0.5
      %v1377 = vmul.f32 %v1351, 0.5
      %v1378 = vmul.f32 %v1354, 0.5
      %v1379 = vmul.f32 %v1359, 0.5
      %v1380 = vmul.f32 %v1362, 0.5
      %v1381 = vmul.f32 %v1303, 0.70710677
      %v1382 = vmul.f32 %v1306, 0.70710677
      %v1383 = vmul.f32 %v1311, 0.70710677
      %v1384 = vmul.f32 %v1314, 0.70710677
      %v1385 = vmul.f32 %v1319, 0.70710677
      %v1386 = vmul.f32 %v1322, 0.70710677
      %v1387 = vmul.f32 %v1327, 0.70710677
      %v1388 = vmul.f32 %v1330, 0.70710677
      %v1389 = vmul.f32 %v1335, 0.70710677
      %v1390 = vmul.f32 %v1338, 0.70710677
      %v1391 = vmul.f32 %v1343, 0.70710677
      %v1392 = vmul.f32 %v1346, 0.70710677
      %v1393 = vmul.f32 %v1351, 0.70710677
      %v1394 = vmul.f32 %v1354, 0.70710677
      %v1395 = vmul.f32 %v1359, 0.70710677
      %v1396 = vmul.f32 %v1362, 0.70710677
      %v1397 = verf.f32.pop %v1381
      %v1398 = verf.f32.pop %v1382
      %v1399 = verf.f32.pop %v1383
      %v1400 = verf.f32.pop %v1384
      %v1401 = verf.f32.pop %v1385
      %v1402 = verf.f32.pop %v1386
      %v1403 = verf.f32.pop %v1387
      %v1404 = verf.f32.pop %v1388
      %v1405 = verf.f32.pop %v1389
      %v1406 = verf.f32.pop %v1390
      %v1407 = verf.f32.pop %v1391
      %v1408 = verf.f32.pop %v1392
      %v1409 = verf.f32.pop %v1393
      %v1410 = verf.f32.pop %v1394
      %v1411 = verf.f32.pop %v1395
      %v1412 = verf.f32.pop %v1396
      %v1413 = vadd.f32 %v1397, 1.0
      %v1414 = vadd.f32 %v1398, 1.0
      %v1415 = vadd.f32 %v1399, 1.0
      %v1416 = vadd.f32 %v1400, 1.0
      %v1417 = vadd.f32 %v1401, 1.0
      %v1418 = vadd.f32 %v1402, 1.0
      %v1419 = vadd.f32 %v1403, 1.0
      %v1420 = vadd.f32 %v1404, 1.0
      %v1421 = vadd.f32 %v1405, 1.0
      %v1422 = vadd.f32 %v1406, 1.0
      %v1423 = vadd.f32 %v1407, 1.0
      %v1424 = vadd.f32 %v1408, 1.0
      %v1425 = vadd.f32 %v1409, 1.0
      %v1426 = vadd.f32 %v1410, 1.0
      %v1427 = vadd.f32 %v1411, 1.0
      %v1428 = vadd.f32 %v1412, 1.0
      %v1429 = vmul.f32 %v1365, %v1413
      %v1430 = vmul.f32 %v1366, %v1414
      %v1431 = vmul.f32 %v1367, %v1415
      %v1432 = vmul.f32 %v1368, %v1416
      %v1433 = vmul.f32 %v1369, %v1417
      %v1434 = vmul.f32 %v1370, %v1418
      %v1435 = vmul.f32 %v1371, %v1419
      %v1436 = vmul.f32 %v1372, %v1420
      %v1437 = vmul.f32 %v1373, %v1421
      %v1438 = vmul.f32 %v1374, %v1422
      %v1439 = vmul.f32 %v1375, %v1423
      %v1440 = vmul.f32 %v1376, %v1424
      %v1441 = vmul.f32 %v1377, %v1425
      %v1442 = vmul.f32 %v1378, %v1426
      %v1443 = vmul.f32 %v1379, %v1427
      %v1444 = vmul.f32 %v1380, %v1428
      %v1445 = vpack.c.bf16 %v1430, %v1429
      %v1446 = vpack.c.bf16 %v1432, %v1431
      %v1447 = vpack.c.bf16 %v1434, %v1433
      %v1448 = vpack.c.bf16 %v1436, %v1435
      %v1449 = vpack.c.bf16 %v1438, %v1437
      %v1450 = vpack.c.bf16 %v1440, %v1439
      %v1451 = vpack.c.bf16 %v1442, %v1441
      %v1452 = vpack.c.bf16 %v1444, %v1443
      %1453 = vmatprep.subr.bf16.mxu0 0
      %1454 = vmatpush1.bf16.msra.mxu0 %v872
      %1455 = vmatprep.subr.bf16.mxu0 0
      %1456 = vmatpush1.bf16.msra.mxu0 %v873
      %1457 = vmatprep.subr.bf16.mxu0 0
      %1458 = vmatpush1.bf16.msra.mxu0 %v874
      %1459 = vmatprep.subr.bf16.mxu0 0
      %1460 = vmatpush1.bf16.msra.mxu0 %v875
      %1461 = vmatprep.subr.bf16.mxu0 0
      %1462 = vmatpush1.bf16.msra.mxu0 %v876
      %1463 = vmatprep.subr.bf16.mxu0 0
      %1464 = vmatpush1.bf16.msra.mxu0 %v877
      %1465 = vmatprep.subr.bf16.mxu0 0
      %1466 = vmatpush1.bf16.msra.mxu0 %v878
      %1467 = vmatprep.subr.bf16.mxu0 0
      %1468 = vmatpush1.bf16.msra.mxu0 %v879
      %1469 = vmatprep.subr.bf16.mxu0 0
      %1470 = vmatpush1.bf16.msra.mxu0 0
      %1471 = vmatprep.subr.bf16.mxu0 0
      %1472 = vmatpush1.bf16.msra.mxu0 0
      %1473 = vmatprep.subr.bf16.mxu0 0
      %1474 = vmatpush1.bf16.msra.mxu0 0
      %1475 = vmatprep.subr.bf16.mxu0 0
      %1476 = vmatpush1.bf16.msra.mxu0 0
      %1477 = vmatprep.subr.bf16.mxu0 0
      %1478 = vmatpush1.bf16.msra.mxu0 0
      %1479 = vmatprep.subr.bf16.mxu0 0
      %1480 = vmatpush1.bf16.msra.mxu0 0
      %1481 = vmatprep.subr.bf16.mxu0 0
      %1482 = vmatpush1.bf16.msra.mxu0 0
      %1483 = vmatprep.subr.bf16.mxu0 0
      %1484 = vmatpush1.bf16.msra.mxu0 0
      %1485 = vmatprep.mubr.bf16.mxu0 0
      %1486 = vmatmul.mubr.bf16.gmra.mrb[0].mxu0 %v1445
      %v1487 = vpop.f32.mrb[0].mxu0
      %v1488 = vadd.f32 %v838, %v1487
      %v1489 = vpop.f32.mrb[0].mxu0
      %v1490 = vpop.f32.mrb[0].mxu0
      %v1491 = vadd.f32 %v838, %v1490
      %v1492 = vpop.f32.mrb[0].mxu0
      %1493 = vmatprep.mubr.bf16.mxu0 0
      %1494 = vmatmul.mubr.bf16.gmra.mrb[0].mxu0 %v1446
      %v1495 = vpop.f32.mrb[0].mxu0
      %v1496 = vadd.f32 %v838, %v1495
      %v1497 = vpop.f32.mrb[0].mxu0
      %v1498 = vpop.f32.mrb[0].mxu0
      %v1499 = vadd.f32 %v838, %v1498
      %v1500 = vpop.f32.mrb[0].mxu0
      %1501 = vmatprep.mubr.bf16.mxu0 0
      %1502 = vmatmul.mubr.bf16.gmra.mrb[0].mxu0 %v1447
      %v1503 = vpop.f32.mrb[0].mxu0
      %v1504 = vadd.f32 %v838, %v1503
      %v1505 = vpop.f32.mrb[0].mxu0
      %v1506 = vpop.f32.mrb[0].mxu0
      %v1507 = vadd.f32 %v838, %v1506
      %v1508 = vpop.f32.mrb[0].mxu0
      %1509 = vmatprep.mubr.bf16.mxu0 0
      %1510 = vmatmul.mubr.bf16.gmra.mrb[0].mxu0 %v1448
      %v1511 = vpop.f32.mrb[0].mxu0
      %v1512 = vadd.f32 %v838, %v1511
      %v1513 = vpop.f32.mrb[0].mxu0
      %v1514 = vpop.f32.mrb[0].mxu0
      %v1515 = vadd.f32 %v838, %v1514
      %v1516 = vpop.f32.mrb[0].mxu0
      %1517 = vmatprep.mubr.bf16.mxu0 0
      %1518 = vmatmul.mubr.bf16.gmra.mrb[0].mxu0 %v1449
      %v1519 = vpop.f32.mrb[0].mxu0
      %v1520 = vadd.f32 %v838, %v1519
      %v1521 = vpop.f32.mrb[0].mxu0
      %v1522 = vpop.f32.mrb[0].mxu0
      %v1523 = vadd.f32 %v838, %v1522
      %v1524 = vpop.f32.mrb[0].mxu0
      %1525 = vmatprep.mubr.bf16.mxu0 0
      %1526 = vmatmul.mubr.bf16.gmra.mrb[0].mxu0 %v1450
      %v1527 = vpop.f32.mrb[0].mxu0
      %v1528 = vadd.f32 %v838, %v1527
      %v1529 = vpop.f32.mrb[0].mxu0
      %v1530 = vpop.f32.mrb[0].mxu0
      %v1531 = vadd.f32 %v838, %v1530
      %v1532 = vpop.f32.mrb[0].mxu0
      %1533 = vmatprep.mubr.bf16.mxu0 0
      %1534 = vmatmul.mubr.bf16.gmra.mrb[0].mxu0 %v1451
      %v1535 = vpop.f32.mrb[0].mxu0
      %v1536 = vadd.f32 %v838, %v1535
      %v1537 = vpop.f32.mrb[0].mxu0
      %v1538 = vpop.f32.mrb[0].mxu0
      %v1539 = vadd.f32 %v838, %v1538
      %v1540 = vpop.f32.mrb[0].mxu0
      %1541 = vmatprep.mubr.bf16.mxu0 0
      %1542 = vmatmul.mubr.bf16.gmra.mrb[0].mxu0 %v1452
      %v1543 = vpop.f32.mrb[0].mxu0
      %v1544 = vadd.f32 %v838, %v1543
      %v1545 = vpop.f32.mrb[0].mxu0
      %v1546 = vpop.f32.mrb[0].mxu0
      %v1547 = vadd.f32 %v838, %v1546
      %v1548 = vpop.f32.mrb[0].mxu0
      %1549 = vdwg.mxu0
      %s1550 = scalar_lea.vmem %s280, 128
      %1551 = vst.msk [vmem:[%s1550] sm:$0xff] %vm985, %v1488
      %1552 = vst.msk [vmem:[%s1550 + $0x8] sm:$0xff] %vm985, %v1491
      %1553 = vst.msk [vmem:[%s1550 + $0x10] sm:$0xff] %vm985, %v1496
      %1554 = vst.msk [vmem:[%s1550 + $0x18] sm:$0xff] %vm985, %v1499
      %1555 = vst.msk [vmem:[%s1550 + $0x20] sm:$0xff] %vm985, %v1504
      %1556 = vst.msk [vmem:[%s1550 + $0x28] sm:$0xff] %vm985, %v1507
      %1557 = vst.msk [vmem:[%s1550 + $0x30] sm:$0xff] %vm985, %v1512
      %1558 = vst.msk [vmem:[%s1550 + $0x38] sm:$0xff] %vm985, %v1515
      %1559 = vst.msk [vmem:[%s1550 + $0x40] sm:$0xff] %vm985, %v1520
      %1560 = vst.msk [vmem:[%s1550 + $0x48] sm:$0xff] %vm985, %v1523
      %1561 = vst.msk [vmem:[%s1550 + $0x50] sm:$0xff] %vm985, %v1528
      %1562 = vst.msk [vmem:[%s1550 + $0x58] sm:$0xff] %vm985, %v1531
      %1563 = vst.msk [vmem:[%s1550 + $0x60] sm:$0xff] %vm985, %v1536
      %1564 = vst.msk [vmem:[%s1550 + $0x68] sm:$0xff] %vm985, %v1539
      %1565 = vst.msk [vmem:[%s1550 + $0x70] sm:$0xff] %vm985, %v1544
      %1566 = vst.msk [vmem:[%s1550 + $0x78] sm:$0xff] %vm985, %v1547
      %s1567 = smul.u32 32, %s18
      %p1568 = scmp.lt.s32.totalorder %s1567, 63
      %s1569 = scalar_select %p1568, %s1567, 63
      %s1570 = smul.addr %s1569, 8
      %s1571 = scalar_lea.vmem %s7, %s1570
      // Predicated region
      $region49: #{tpu_custom_call.1} parent=47 // pred_check
        %p1572 = pneg %p188
      $region50: #{tpu_custom_call.1} parent=47 // pred_check_branch
        %1574 = sbr.rel (%p1572) target = $region52
      $region51: #{tpu_custom_call.1} parent=47 // pred_region
        %s1575 = smul.u32 32, %s18
      $region52: #{tpu_custom_call.1} parent=47 // pred_fallthru
        _
    $region48: #{tpu_custom_call.1} parent=5 // pred_fallthru
      _
    %p1576 = scmp.le.s32.totalorder 2, %s13
    // Predicated region
    $region53: #{tpu_custom_call.1} parent=5 // pred_check
      %p1577 = pneg %p1576
    $region54: #{tpu_custom_call.1} parent=5 // pred_check_branch
      %1579 = sbr.rel (%p1577) target = $region56
    $region55: #{tpu_custom_call.1} parent=5 // pred_region
      %s1580 = ssub.s32 %s13, 2
      // Predicated region
      $region57: #{tpu_custom_call.1} parent=55 // pred_check
        %p1581 = pneg %p194
      $region58: #{tpu_custom_call.1} parent=55 // pred_check_branch
        %1583 = sbr.rel (%p1581) target = $region60
      $region59: #{tpu_custom_call.1} parent=55 // pred_region
        %s1584 = smul.u32 32, %s19
        %p1585 = scmp.lt.s32.totalorder %s1584, 63
        %s1586 = scalar_select %p1585, %s1584, 63
        %s1587 = smul.addr %s1586, 8
        %s1588 = scalar_lea.vmem %s7, %s1587
      $region60: #{tpu_custom_call.1} parent=55 // pred_fallthru
        _
    $region56: #{tpu_custom_call.1} parent=5 // pred_fallthru
      _
  $region6: #{tpu_custom_call.1} parent=0 // loop_footer
    %s17 = sadd.s32 1, %s13
  $region7: #{tpu_custom_call.1} parent=0 // loop_footer_branch
    %12 = sbr.rel target = $region3
  $region8: #{tpu_custom_call.1} parent=0 // loop_exit
    _

</llo_original>
